<compile_context>
chip_gen: v6e
topology: v6e:2x2x1
jax: 0.10.0
libtpu: 0.0.40
codegen_flags: <defaults>
</compile_context>

<pallas_src>
import jax
import jax.numpy as jnp
from jax.experimental import pallas as pl
from jax.experimental.pallas import tpu as pltpu

FEAT_DIM = 768


def _round_up(x, m):
    return ((x + m - 1) // m) * m


def _classifier_kernel(x_ref, wb_ref, wfc_ref, bfc_ref, out_ref, acc_ref):
    k = pl.program_id(1)

    @pl.when(k == 0)
    def _():
        acc_ref[...] = jnp.zeros_like(acc_ref)

    # Backbone stand-in: cast the f32 x block to bf16 in-register (VPU work
    # hidden under the MXU) and accumulate the bf16 MXU matmul in f32.
    acc_ref[...] += jnp.dot(x_ref[...].astype(jnp.bfloat16), wb_ref[...],
                            preferred_element_type=jnp.float32)

    @pl.when(k == pl.num_programs(1) - 1)
    def _():
        feats = acc_ref[...]                                # (tile_m, 768) f32
        # nn.Dropout(0.3): identity at inference (eval mode) -> no-op.
        # Head Linear(768, 1): VPU multiply + XLU lane reduce instead of an
        # N=1 MXU matmul; bias (with folded-in backbone bias) is an SMEM scalar.
        logits = jnp.sum(feats * wfc_ref[...], axis=-1)     # (tile_m,)
        probs = jax.nn.sigmoid(logits + bfc_ref[0])
        out_ref[...] = probs[None, None, :]                 # lane-dense store


def osteoarthritis_classifier(x, w_backbone, b_backbone, w_fc, b_fc,
                              *, block_m=128, block_k=512):
    """x: (B, C, H, W) float32 NCHW.  Returns sigmoid probabilities (B, 1)."""
    B = x.shape[0]
    x_flat = x.reshape(B, -1).astype(jnp.float32)
    K = x_flat.shape[1]

    # Balanced batch tiling (block_m=128 matches the v5e 128-row MXU and gives
    # >= 2 grid tiles as soon as B > 128 so v7x megacore sharding engages).
    nm = max(1, -(-B // block_m))
    tile_m = _round_up(-(-B // nm), 16)
    b_pad = tile_m * nm

    # K tiling: caps the VMEM working set independent of backbone input size.
    nk = max(1, -(-K // block_k))
    tk = _round_up(-(-K // nk), 128)
    k_pad = tk * nk

    if (b_pad, k_pad) != (B, K):
        x_flat = jnp.pad(x_flat, ((0, b_pad - B), (0, k_pad - K)))

    wb_bf16 = w_backbone.astype(jnp.bfloat16)
    if k_pad != K:
        wb_bf16 = jnp.pad(wb_bf16, ((0, k_pad - K), (0, 0)))

    wfc_row = w_fc.reshape(1, FEAT_DIM).astype(jnp.float32)
    # Fold the backbone bias into the fc bias (exact: the head is linear and
    # dropout is identity at inference):
    #   fc(xW + b_b) = (xW) @ w_fc^T + (b_fc + b_b @ w_fc^T)
    bfc_eff = (b_fc.reshape(()).astype(jnp.float32) +
               jnp.dot(b_backbone.astype(jnp.float32),
                       w_fc.reshape(FEAT_DIM).astype(jnp.float32))).reshape(1)

    # Explicit scoped-VMEM budget with headroom (double-buffered pipeline
    # blocks + accumulator scratch), clamped to v7x's 64 MiB physical VMEM.
    vmem_bytes = (2 * tile_m * tk * 4          # x blocks (f32, double-buffered)
                  + 2 * tk * FEAT_DIM * 2      # W_backbone blocks (bf16)
                  + 2 * FEAT_DIM * 4           # fc weight row
                  + tile_m * FEAT_DIM * 4      # f32 accumulator scratch
                  + 2 * tile_m * 4)            # output block
    vmem_limit = int(min(max(2 * vmem_bytes, 32 << 20), 64 << 20))

    grid = (nm, nk)
    out = pl.pallas_call(
        _classifier_kernel,
        out_shape=jax.ShapeDtypeStruct((nm, 1, tile_m), jnp.float32),
        grid=grid,
        in_specs=[
            pl.BlockSpec((tile_m, tk), lambda i, k: (i, k)),      # x tile (f32)
            pl.BlockSpec((tk, FEAT_DIM), lambda i, k: (k, 0)),    # W_backbone tile (bf16)
            pl.BlockSpec((1, FEAT_DIM), lambda i, k: (0, 0)),     # fc weight row
            pl.BlockSpec(memory_space=pltpu.MemorySpace.SMEM),    # folded fc bias scalar
        ],
        out_specs=pl.BlockSpec((1, 1, tile_m), lambda i, k: (i, 0, 0)),
        scratch_shapes=[pltpu.VMEM((tile_m, FEAT_DIM), jnp.float32)],
        compiler_params=pltpu.CompilerParams(
            dimension_semantics=("parallel", "arbitrary"),
            vmem_limit_bytes=vmem_limit),
    )(x_flat, wb_bf16, wfc_row, bfc_eff)
    return out.reshape(-1)[:B].reshape(B, 1)


def init_params(key, in_features, feat_dim=FEAT_DIM):
    """nn.Linear-style uniform init; fc weight kept in PyTorch (1, 768) layout."""
    k1, k2, k3, k4 = jax.random.split(key, 4)
    bnd_b = 1.0 / jnp.sqrt(in_features)
    bnd_f = 1.0 / jnp.sqrt(feat_dim)
    w_backbone = jax.random.uniform(k1, (in_features, feat_dim), jnp.float32,
                                    -bnd_b, bnd_b)
    b_backbone = jax.random.uniform(k2, (feat_dim,), jnp.float32, -bnd_b, bnd_b)
    w_fc = jax.random.uniform(k3, (1, feat_dim), jnp.float32, -bnd_f, bnd_f)
    b_fc = jax.random.uniform(k4, (1,), jnp.float32, -bnd_f, bnd_f)
    return w_backbone, b_backbone, w_fc, b_fc


if __name__ == "__main__":
    key = jax.random.PRNGKey(0)
    kx, kp = jax.random.split(key)

    B, C, H, W = 2, 4, 16, 16                       # small NCHW input
    x = jax.random.normal(kx, (B, C, H, W), jnp.float32)
    w_b, b_b, w_f, b_f = init_params(kp, in_features=C * H * W)

    out = jax.block_until_ready(
        osteoarthritis_classifier(x, w_b, b_b, w_f, b_f))
    assert out.shape == (B, 1)

    x_flat = x.reshape(B, -1)

    # Reference 1: same math with bf16-cast matmul operands (kernel numerics).
    feats_bf = (x_flat.astype(jnp.bfloat16).astype(jnp.float32)
                @ w_b.astype(jnp.bfloat16).astype(jnp.float32)) + b_b
    ref_bf = jax.nn.sigmoid(feats_bf @ w_f.T + b_f)
    assert jnp.allclose(out, ref_bf, atol=2e-4, rtol=2e-4), \
        f"max err vs bf16 ref: {jnp.max(jnp.abs(out - ref_bf))}"

    # Reference 2: full-f32 math (wider tolerance for the bf16 weight cast).
    ref_f32 = jax.nn.sigmoid((x_flat @ w_b + b_b) @ w_f.T + b_f)
    assert jnp.allclose(out, ref_f32, atol=2e-2), \
        f"max err vs f32 ref: {jnp.max(jnp.abs(out - ref_f32))}"

    print("KERNEL_OK")
</pallas_src>

<mosaic_0001>
module attributes {stable_mosaic.version = 11 : i64} {
  func.func @_classifier_kernel(%arg0: i32, %arg1: i32, %arg2: memref<16x512xf32, #tpu.memory_space<vmem>>, %arg3: memref<512x768xbf16, #tpu.memory_space<vmem>>, %arg4: memref<1x768xf32, #tpu.memory_space<vmem>>, %arg5: memref<1xf32, #tpu.memory_space<smem>>, %arg6: memref<1x1x16xf32, #tpu.memory_space<vmem>>, %arg7: memref<16x768xf32, #tpu.memory_space<vmem>>) attributes {dimension_semantics = [#tpu.dimension_semantics<parallel>, #tpu.dimension_semantics<arbitrary>], iteration_bounds = array<i64: 1, 2>, scalar_prefetch = 0 : i64, scratch_operands = 1 : i64, tpu.core_type = #tpu.core_type<tc>, window_params = [{transform_indices = @transform_0, window_bounds = array<i64: 16, 512>}, {transform_indices = @transform_1, window_bounds = array<i64: 512, 768>}, {pipeline_mode = #tpu.pipeline_mode<synchronous>, transform_indices = @transform_2, window_bounds = array<i64: 1, 768>}, {transform_indices = @transform_3, window_bounds = array<i64: 1>}, {transform_indices = @transform_4, window_bounds = array<i64: 1, 1, 16>}]} {
    %c0_i32 = arith.constant 0 : i32
    %0 = arith.cmpi eq, %arg1, %c0_i32 : i32
    %1 = arith.extui %0 : i1 to i32
    %c0_i32_0 = arith.constant 0 : i32
    %2 = arith.cmpi ne, %1, %c0_i32_0 : i32
    scf.if %2 {
      %cst_9 = arith.constant 0.000000e+00 : f32
      %13 = vector.broadcast %cst_9 : f32 to vector<16x768xf32>
      %c0_10 = arith.constant 0 : index
      %c0_11 = arith.constant 0 : index
      %14 = vector.load %arg7[%c0_10, %c0_11] : memref<16x768xf32, #tpu.memory_space<vmem>>, vector<16x768xf32>
      tpu.vector_store %arg7[%c0_10, %c0_11], %13 {strides = array<i32>} : memref<16x768xf32, #tpu.memory_space<vmem>>, vector<16x768xf32>,
    } else {
    }
    %c0 = arith.constant 0 : index
    %c0_1 = arith.constant 0 : index
    %3 = vector.load %arg7[%c0, %c0_1] : memref<16x768xf32, #tpu.memory_space<vmem>>, vector<16x768xf32>
    %c0_2 = arith.constant 0 : index
    %c0_3 = arith.constant 0 : index
    %4 = vector.load %arg2[%c0_2, %c0_3] : memref<16x512xf32, #tpu.memory_space<vmem>>, vector<16x512xf32>
    %5 = arith.truncf %4 : vector<16x512xf32> to vector<16x512xbf16>
    %c0_4 = arith.constant 0 : index
    %c0_5 = arith.constant 0 : index
    %6 = vector.load %arg3[%c0_4, %c0_5] : memref<512x768xbf16, #tpu.memory_space<vmem>>, vector<512x768xbf16>
    %cst = arith.constant dense<0.000000e+00> : vector<16x768xf32>
    %7 = tpu.matmul %5, %6, %cst {dimension_numbers = #tpu.dot_dimension_numbers<[1], [0], [0], [1], [0, 0, 1, 1], [], []>} : vector<16x512xbf16>, vector<512x768xbf16>, vector<16x768xf32> -> vector<16x768xf32>
    %8 = arith.addf %3, %7 : vector<16x768xf32>
    %c0_6 = arith.constant 0 : index
    %c0_7 = arith.constant 0 : index
    %9 = vector.load %arg7[%c0_6, %c0_7] : memref<16x768xf32, #tpu.memory_space<vmem>>, vector<16x768xf32>
    tpu.vector_store %arg7[%c0_6, %c0_7], %8 {strides = array<i32>} : memref<16x768xf32, #tpu.memory_space<vmem>>, vector<16x768xf32>,
    %c1_i32 = arith.constant 1 : i32
    %10 = arith.cmpi eq, %arg1, %c1_i32 : i32
    %11 = arith.extui %10 : i1 to i32
    %c0_i32_8 = arith.constant 0 : i32
    %12 = arith.cmpi ne, %11, %c0_i32_8 : i32
    scf.if %12 {
      %c0_9 = arith.constant 0 : index
      %c0_10 = arith.constant 0 : index
      %13 = vector.load %arg7[%c0_9, %c0_10] : memref<16x768xf32, #tpu.memory_space<vmem>>, vector<16x768xf32>
      %c0_11 = arith.constant 0 : index
      %c0_12 = arith.constant 0 : index
      %14 = vector.load %arg4[%c0_11, %c0_12] : memref<1x768xf32, #tpu.memory_space<vmem>>, vector<1x768xf32>
      %15 = vector.broadcast %14 : vector<1x768xf32> to vector<16x768xf32>
      %16 = arith.mulf %13, %15 : vector<16x768xf32>
      %cst_13 = arith.constant dense<0.000000e+00> : vector<16xf32>
      %17 = vector.multi_reduction <add>, %16, %cst_13 [1] : vector<16x768xf32> to vector<16xf32>
      %c0_14 = arith.constant 0 : index
      %18 = memref.load %arg5[%c0_14] : memref<1xf32, #tpu.memory_space<smem>>
      %19 = vector.broadcast %18 : f32 to vector<16xf32>
      %20 = arith.addf %17, %19 : vector<16xf32>
      %21 = arith.negf %20 : vector<16xf32>
      %22 = math.exp %21 : vector<16xf32>
      %cst_15 = arith.constant 1.000000e+00 : f32
      %23 = vector.broadcast %cst_15 : f32 to vector<16xf32>
      %24 = arith.addf %23, %22 : vector<16xf32>
      %25 = arith.divf %23, %24 : vector<16xf32>
      %26 = vector.shape_cast %25 : vector<16xf32> to vector<1x1x16xf32>
      %c0_16 = arith.constant 0 : index
      %c0_17 = arith.constant 0 : index
      %c0_18 = arith.constant 0 : index
      %27 = vector.load %arg6[%c0_16, %c0_17, %c0_18] : memref<1x1x16xf32, #tpu.memory_space<vmem>>, vector<1x1x16xf32>
      tpu.vector_store %arg6[%c0_16, %c0_17, %c0_18], %26 {strides = array<i32>} : memref<1x1x16xf32, #tpu.memory_space<vmem>>, vector<1x1x16xf32>,
    } else {
    }
    return
  }
  func.func @transform_0(%arg0: i32, %arg1: i32) -> (i32, i32) {
    %c0_i32 = arith.constant 0 : i32
    return %arg0, %arg1 : i32, i32
  }
  func.func @transform_1(%arg0: i32, %arg1: i32) -> (i32, i32) {
    %c0_i32 = arith.constant 0 : i32
    %c0_i32_0 = arith.constant 0 : i32
    return %arg1, %c0_i32 : i32, i32
  }
  func.func @transform_2(%arg0: i32, %arg1: i32) -> (i32, i32) {
    %c0_i32 = arith.constant 0 : i32
    %c0_i32_0 = arith.constant 0 : i32
    %c0_i32_1 = arith.constant 0 : i32
    return %c0_i32, %c0_i32_0 : i32, i32
  }
  func.func @transform_3(%arg0: i32, %arg1: i32) -> i32 {
    %c0_i32 = arith.constant 0 : i32
    %c0_i32_0 = arith.constant 0 : i32
    return %c0_i32 : i32
  }
  func.func @transform_4(%arg0: i32, %arg1: i32) -> (i32, i32, i32) {
    %c0_i32 = arith.constant 0 : i32
    %c0_i32_0 = arith.constant 0 : i32
    %c0_i32_1 = arith.constant 0 : i32
    return %arg0, %c0_i32, %c0_i32_0 : i32, i32, i32
  }
}

</mosaic_0001>

<llo_original>
// kernel: tpu_custom_call.1
$region0: #{tpu_custom_call.1}
  #allocation0 [shape = 'u32[]', space=smem, size = 0x4, offset = 0x4, fixed_abs, tag = 'smem constant byte address 0x4 - core index']
  #allocation1 [shape = 'u32[144,128]{1,0:T(1,128)}', space=vmem, size = 0x12000, scoped, tag = 'internal scratch']
  #allocation2 [shape = 'f32[16,768]{1,0:T(8,128)}', space=vmem, size = 0xc000, scoped, tag = 'scratch operand']
  #allocation3 [shape = 'f32[1]{0:T(128)S(6)}', space=smem, size = 0x200, scoped, tag = 'scoped memory for tpu_custom_call.1']
  %s0 = inlined_call_operand.hbm [shape: f32[16,1024], index: 0, kind: input, shape index: {}]
  %s1 = inlined_call_operand.hbm [shape: bf16[1024,768], index: 1, kind: input, shape index: {}]
  %s2 = inlined_call_operand.hbm [shape: f32[1,768], index: 2, kind: input, shape index: {}]
  %s3 = inlined_call_operand.<no memory space> [shape: f32[1], index: 3, kind: input, shape index: {}]
  %s4 = inlined_call_operand.hbm [shape: f32[1,1,16], index: 4, kind: output, shape index: {}]
  %s5 = sld [smem:[#allocation0]]
  $region69: #{tpu_custom_call.1} parent=0
    _
  %s7 = ssub.s32 1, %s5
  %s8 = scalar_select 0, %s7, %s5
  %9 = sst [smem:[#allocation3]] %s3
  $region1: #{tpu_custom_call.1} parent=0
    #allocation4 [shape = 'u8[65536]{0}', space=vmem, size = 0x10000, scoped, tag = 'input window, operand 0']
    #allocation5 [shape = 's32[2]{0}', space=sflag, size = 0x8, scoped, tag = 'scoped memory for tpu_custom_call.1']
    #allocation6 [shape = 's32[2]{0}', space=sflag, size = 0x8, scoped, tag = 'scoped memory for tpu_custom_call.1']
    #allocation7 [shape = 'u8[1572864]{0}', space=vmem, size = 0x180000, scoped, tag = 'input window, operand 1']
    #allocation8 [shape = 's32[2]{0}', space=sflag, size = 0x8, scoped, tag = 'scoped memory for tpu_custom_call.1']
    #allocation9 [shape = 'u8[3072]{0}', space=vmem, size = 0xc00, scoped, tag = 'input window, operand 2, single buffered']
    #allocation10 [shape = 'u8[512]{0}', space=vmem, size = 0x400, scoped, tag = 'output window, operand 0, single buffered']
    %10 = vsyncpa [#allocation5], 0
    %s11 = scalar_lea.sflag [#allocation5], 1
    %12 = vsyncpa %s11, 0
    %13 = vsyncpa [#allocation8], 0
    %s14 = scalar_lea.sflag [#allocation8], 1
    %15 = vsyncpa %s14, 0
    %16 = vsyncpa [#allocation6], 0
    loop: start=0, step=1, limit=4
    $region2: #{tpu_custom_call.1} parent=1 // loop_pre_header
      _
    $region3: #{tpu_custom_call.1} parent=1 // loop_header
      %s18 = sphi 0, %s22
      %p19 = scmp.ge.s32.totalorder %s18, 4
      %s25 = sphi 0, %s37
      %s26 = sphi 0, %s33
      %s27 = sphi 0, %s25
      %s28 = sphi 0, %s26
      %s29 = sphi 0, %s27
      %s30 = sphi 0, %s28
      %s42 = sphi 0, %s44
      %s45 = sphi 0, %s42
      %s46 = sphi 0, %s45
      %s62 = sphi 0, %s46
      %s68 = sphi 0, %s70
      %s71 = sphi 0, %s68
      %s72 = sphi 0, %s71
      %s88 = sphi 0, %s72
      %s92 = sphi 0, %s92
      %s94 = sphi 0, %s92
      %s95 = sphi 0, %s94
      %s109 = sphi 0, %s95
      %s113 = sphi 0, %s113
      %s115 = sphi 0, %s113
      %s116 = sphi 0, %s115
      %s130 = sphi 0, %s116
      %s136 = sphi 0, %s138
      %s139 = sphi 0, %s136
      %s140 = sphi 0, %s139
      %s156 = sphi 0, %s140
    $region4: #{tpu_custom_call.1} parent=1 // loop_header_branch
      %21 = sbr.rel (%p19) target = $region8
    $region5: #{tpu_custom_call.1} parent=1 // loop_body
      %s23 = ssub.s32 %s18, 1
      %s24 = ssub.s32 %s18, 2
      %s31 = sadd.s32 1, %s26
      %p32 = scmp.ge.s32.totalorder %s31, 2
      %s33 = scalar_select %p32, 0, %s31
      %s34 = sadd.s32 1, %s25
      %s35 = scalar_select %p32, %s34, %s25
      %p36 = scmp.ge.s32.totalorder %s35, 1
      %s37 = scalar_select %p36, 0, %s35
      %s38 = ssub.s32 %s25, %s37
      %s39 = ssub.s32 %s26, %s33
      %s40 = sor.u32 %s38, %s39
      %p41 = scmp.eq.s32.totalorder %s40, 0
      %s43 = sadd.s32 %s42, 1
      %s44 = scalar_select %p41, %s42, %s43
      %p47 = pneg %p41
      %p48 = scmp.eq.s32.totalorder %s18, 1
      %p49 = por %p47, %p48
      %p50 = scmp.ne.s32.totalorder %s42, %s45
      %p51 = scmp.eq.s32.totalorder %s18, 0
      %p52 = por %p50, %p51
      %p53 = scmp.ne.s32.totalorder %s42, %s45
      %p54 = scmp.eq.s32.totalorder %s23, 1
      %p55 = por %p53, %p54
      %p56 = scmp.ne.s32.totalorder %s45, %s46
      %p57 = scmp.eq.s32.totalorder %s23, 0
      %p58 = por %p56, %p57
      %p59 = scmp.ne.s32.totalorder %s45, %s46
      %p60 = scmp.eq.s32.totalorder %s24, 1
      %p61 = por %p59, %p60
      %p63 = scmp.ne.s32.totalorder %s46, %s62
      %p64 = scmp.eq.s32.totalorder %s24, 0
      %p65 = por %p63, %p64
      %s66 = ssub.s32 %s26, %s33
      %p67 = scmp.eq.s32.totalorder %s66, 0
      %s69 = sadd.s32 %s68, 1
      %s70 = scalar_select %p67, %s68, %s69
      %p73 = pneg %p67
      %p74 = scmp.eq.s32.totalorder %s18, 1
      %p75 = por %p73, %p74
      %p76 = scmp.ne.s32.totalorder %s68, %s71
      %p77 = scmp.eq.s32.totalorder %s18, 0
      %p78 = por %p76, %p77
      %p79 = scmp.ne.s32.totalorder %s68, %s71
      %p80 = scmp.eq.s32.totalorder %s23, 1
      %p81 = por %p79, %p80
      %p82 = scmp.ne.s32.totalorder %s71, %s72
      %p83 = scmp.eq.s32.totalorder %s23, 0
      %p84 = por %p82, %p83
      %p85 = scmp.ne.s32.totalorder %s71, %s72
      %p86 = scmp.eq.s32.totalorder %s24, 1
      %p87 = por %p85, %p86
      %p89 = scmp.ne.s32.totalorder %s72, %s88
      %p90 = scmp.eq.s32.totalorder %s24, 0
      %p91 = por %p89, %p90
      %s93 = sadd.s32 %s92, 1
      %p96 = scmp.eq.s32.totalorder %s18, 1
      %p97 = scmp.ne.s32.totalorder %s92, %s94
      %p98 = scmp.eq.s32.totalorder %s18, 0
      %p99 = por %p97, %p98
      %p100 = scmp.ne.s32.totalorder %s92, %s94
      %p101 = scmp.eq.s32.totalorder %s23, 1
      %p102 = por %p100, %p101
      %p103 = scmp.ne.s32.totalorder %s94, %s95
      %p104 = scmp.eq.s32.totalorder %s23, 0
      %p105 = por %p103, %p104
      %p106 = scmp.ne.s32.totalorder %s94, %s95
      %p107 = scmp.eq.s32.totalorder %s24, 1
      %p108 = por %p106, %p107
      %p110 = scmp.ne.s32.totalorder %s95, %s109
      %p111 = scmp.eq.s32.totalorder %s24, 0
      %p112 = por %p110, %p111
      %s114 = sadd.s32 %s113, 1
      %p117 = scmp.eq.s32.totalorder %s18, 1
      %p118 = scmp.ne.s32.totalorder %s113, %s115
      %p119 = scmp.eq.s32.totalorder %s18, 0
      %p120 = por %p118, %p119
      %p121 = scmp.ne.s32.totalorder %s113, %s115
      %p122 = scmp.eq.s32.totalorder %s23, 1
      %p123 = por %p121, %p122
      %p124 = scmp.ne.s32.totalorder %s115, %s116
      %p125 = scmp.eq.s32.totalorder %s23, 0
      %p126 = por %p124, %p125
      %p127 = scmp.ne.s32.totalorder %s115, %s116
      %p128 = scmp.eq.s32.totalorder %s24, 1
      %p129 = por %p127, %p128
      %p131 = scmp.ne.s32.totalorder %s116, %s130
      %p132 = scmp.eq.s32.totalorder %s24, 0
      %p133 = por %p131, %p132
      %s134 = ssub.s32 %s25, %s37
      %p135 = scmp.eq.s32.totalorder %s134, 0
      %s137 = sadd.s32 %s136, 1
      %s138 = scalar_select %p135, %s136, %s137
      %p141 = pneg %p135
      %p142 = scmp.eq.s32.totalorder %s18, 1
      %p143 = por %p141, %p142
      %p144 = scmp.ne.s32.totalorder %s136, %s139
      %p145 = scmp.eq.s32.totalorder %s18, 0
      %p146 = por %p144, %p145
      %p147 = scmp.ne.s32.totalorder %s136, %s139
      %p148 = scmp.eq.s32.totalorder %s23, 1
      %p149 = por %p147, %p148
      %p150 = scmp.ne.s32.totalorder %s139, %s140
      %p151 = scmp.eq.s32.totalorder %s23, 0
      %p152 = por %p150, %p151
      %p153 = scmp.ne.s32.totalorder %s139, %s140
      %p154 = scmp.eq.s32.totalorder %s24, 1
      %p155 = por %p153, %p154
      %p157 = scmp.ne.s32.totalorder %s140, %s156
      %p158 = scmp.eq.s32.totalorder %s24, 0
      %p159 = por %p157, %p158
      %p160 = scmp.le.s32.totalorder 1, %s18
      %p161 = scmp.lt.s32.totalorder %s18, 3
      %p162 = pnand %p160, %p161
      %p163 = pneg %p162
      // Predicated region
      $region9: #{tpu_custom_call.1} parent=5 // pred_check
        _
      $region10: #{tpu_custom_call.1} parent=5 // pred_check_branch
        %165 = sbr.rel (%p162) target = $region12
      $region11: #{tpu_custom_call.1} parent=5 // pred_region
        %s166 = ssub.s32 %s18, 1
        // Predicated region
        $region13: #{tpu_custom_call.1} parent=11 // pred_check
          %p167 = pneg %p105
        $region14: #{tpu_custom_call.1} parent=11 // pred_check_branch
          %169 = sbr.rel (%p167) target = $region16
        $region15: #{tpu_custom_call.1} parent=11 // pred_region
          %s171 = ssub.s32 96, 96
          %172 = vsyncadd [#allocation8], %s171
          %s174 = sshll.u32 [#allocation9], 4
          %s175 = int_to_ptr.vmem [resolvable:$true] %s174
          %177 = dma.hbm_to_vmem [thread:$0]  %s2, 96, %s175, [#allocation8]
        $region16: #{tpu_custom_call.1} parent=11 // pred_fallthru
          _
        // Predicated region
        $region17: #{tpu_custom_call.1} parent=11 // pred_check
          %p178 = pneg %p126
        $region18: #{tpu_custom_call.1} parent=11 // pred_check_branch
          %180 = sbr.rel (%p178) target = $region20
        $region19: #{tpu_custom_call.1} parent=11 // pred_region
          _
        $region20: #{tpu_custom_call.1} parent=11 // pred_fallthru
          _
      $region12: #{tpu_custom_call.1} parent=5 // pred_fallthru
        _
      %p181 = scmp.lt.s32.totalorder %s18, 2
      // Predicated region
      $region21: #{tpu_custom_call.1} parent=5 // pred_check
        %p182 = pneg %p181
      $region22: #{tpu_custom_call.1} parent=5 // pred_check_branch
        %184 = sbr.rel (%p182) target = $region24
      $region23: #{tpu_custom_call.1} parent=5 // pred_region
        // Predicated region
        $region25: #{tpu_custom_call.1} parent=23 // pred_check
          %p185 = pneg %p52
        $region26: #{tpu_custom_call.1} parent=23 // pred_check_branch
          %187 = sbr.rel (%p185) target = $region28
        $region27: #{tpu_custom_call.1} parent=23 // pred_region
          %s188 = sand.u32 %s42, 1
          %s189 = scalar_lea.sflag [#allocation5], %s188
          %s190 = sand.u32 %s42, 1
          %s191 = smul.addr %s190, 64
          %s192 = scalar_lea.vmem [#allocation4], %s191
          %s193 = smul.u32 2, %s25
          %s194 = smul.u32 4, %s26
          %s196 = ssub.s32 1024, 1024
          %197 = vsyncadd %s189, %s196
          %s198 = smul.addr %s193, 8
          %s199 = sadd.s32 %s194, %s198
          %s200 = smul.addr %s199, 128
          %s201 = scalar_lea.hbm %s0, %s200
          %s202 = sshll.u32 %s192, 4
          %s203 = int_to_ptr.vmem [resolvable:$true] %s202
          %208 = dma.hbm_to_vmem [thread:$0]  %s201, 1024, %s203, %s189, 1024, 512, 32
        $region28: #{tpu_custom_call.1} parent=23 // pred_fallthru
          _
        // Predicated region
        $region29: #{tpu_custom_call.1} parent=23 // pred_check
          %p209 = pneg %p78
        $region30: #{tpu_custom_call.1} parent=23 // pred_check_branch
          %211 = sbr.rel (%p209) target = $region32
        $region31: #{tpu_custom_call.1} parent=23 // pred_region
          %s212 = sand.u32 %s18, 1
          %s213 = scalar_lea.sflag [#allocation8], %s212
          %s214 = sand.u32 %s68, 1
          %s215 = smul.addr %s214, 1536
          %s216 = scalar_lea.vmem [#allocation7], %s215
          %s217 = smul.u32 64, %s26
          %s219 = ssub.s32 24576, 24576
          %220 = vsyncadd %s213, %s219
          %s221 = smul.addr %s217, 6
          %s222 = smul.addr %s221, 64
          %s223 = scalar_lea.hbm %s1, %s222
          %s224 = sshll.u32 %s216, 4
          %s225 = int_to_ptr.vmem [resolvable:$true] %s224
          %230 = dma.hbm_to_vmem [thread:$0]  %s223, 24576, %s225, %s213, 384, 384, 24
        $region32: #{tpu_custom_call.1} parent=23 // pred_fallthru
          _
      $region24: #{tpu_custom_call.1} parent=5 // pred_fallthru
        _
      %p231 = scmp.le.s32.totalorder 1, %s18
      %p232 = scmp.lt.s32.totalorder %s18, 3
      %p233 = pnand %p231, %p232
      %p234 = pneg %p233
      // Predicated region
      $region33: #{tpu_custom_call.1} parent=5 // pred_check
        _
      $region34: #{tpu_custom_call.1} parent=5 // pred_check_branch
        %236 = sbr.rel (%p233) target = $region36
      $region35: #{tpu_custom_call.1} parent=5 // pred_region
        %s237 = ssub.s32 %s18, 1
        %s238 = sand.u32 %s45, 1
        %s239 = scalar_lea.sflag [#allocation5], %s238
        %s240 = sand.u32 %s45, 1
        %s241 = smul.addr %s240, 64
        %s242 = scalar_lea.vmem [#allocation4], %s241
        // Predicated region
        $region37: #{tpu_custom_call.1} parent=35 // pred_check
          %p243 = pneg %p58
        $region38: #{tpu_custom_call.1} parent=35 // pred_check_branch
          %245 = sbr.rel (%p243) target = $region40
        $region39: #{tpu_custom_call.1} parent=35 // pred_region
          %246 = dma.done %s239, 1024
        $region40: #{tpu_custom_call.1} parent=35 // pred_fallthru
          _
        %s247 = sand.u32 %s23, 1
        %s248 = scalar_lea.sflag [#allocation8], %s247
        %s249 = sand.u32 %s71, 1
        %s250 = smul.addr %s249, 1536
        %s251 = scalar_lea.vmem [#allocation7], %s250
        // Predicated region
        $region41: #{tpu_custom_call.1} parent=35 // pred_check
          %p252 = pneg %p84
        $region42: #{tpu_custom_call.1} parent=35 // pred_check_branch
          %254 = sbr.rel (%p252) target = $region44
        $region43: #{tpu_custom_call.1} parent=35 // pred_region
          %255 = dma.done %s248, 24576
        $region44: #{tpu_custom_call.1} parent=35 // pred_fallthru
          _
        // Predicated region
        $region45: #{tpu_custom_call.1} parent=35 // pred_check
          %p256 = pneg %p105
        $region46: #{tpu_custom_call.1} parent=35 // pred_check_branch
          %258 = sbr.rel (%p256) target = $region48
        $region47: #{tpu_custom_call.1} parent=35 // pred_region
          %259 = dma.done [#allocation8], 96
        $region48: #{tpu_custom_call.1} parent=35 // pred_fallthru
          _
        %s260 = sand.u32 %s45, 1
        %s261 = scalar_lea.sflag [#allocation5], %s260
        %s262 = sand.u32 %s45, 1
        %s263 = smul.addr %s262, 64
        %s264 = scalar_lea.vmem [#allocation4], %s263
        %p265 = pneg %p58
        %p266 = pneg %p55
        %s267 = sand.u32 %s23, 1
        %s268 = scalar_lea.sflag [#allocation8], %s267
        %s269 = sand.u32 %s71, 1
        %s270 = smul.addr %s269, 1536
        %s271 = scalar_lea.vmem [#allocation7], %s270
        %p272 = pneg %p84
        %p273 = pneg %p81
        %p274 = pneg %p105
        %p275 = pneg %p102
        %p276 = pneg %p126
        %p277 = pneg %p123
        %p278 = pneg %p152
        %p279 = pneg %p149
        %s280 = smul.u32 2, %s27
        %s281 = smul.u32 4, %s28
        %s282 = smul.u32 64, %s28
        %p283 = scmp.eq.s32.totalorder %s28, 0
        // Predicated region
        $region49: #{tpu_custom_call.1} parent=35 // pred_check
          %p284 = pneg %p283
        $region50: #{tpu_custom_call.1} parent=35 // pred_check_branch
          %286 = sbr.rel (%p284) target = $region52
        $region51: #{tpu_custom_call.1} parent=35 // pred_region
          %287 = vst [vmem:[#allocation2] sm:$0xff] 0.0
          %288 = vst [vmem:[#allocation2 + $0x8] sm:$0xff] 0.0
          %289 = vst [vmem:[#allocation2 + $0x10] sm:$0xff] 0.0
          %290 = vst [vmem:[#allocation2 + $0x18] sm:$0xff] 0.0
          %291 = vst [vmem:[#allocation2 + $0x20] sm:$0xff] 0.0
          %292 = vst [vmem:[#allocation2 + $0x28] sm:$0xff] 0.0
          %293 = vst [vmem:[#allocation2 + $0x30] sm:$0xff] 0.0
          %294 = vst [vmem:[#allocation2 + $0x38] sm:$0xff] 0.0
          %295 = vst [vmem:[#allocation2 + $0x40] sm:$0xff] 0.0
          %296 = vst [vmem:[#allocation2 + $0x48] sm:$0xff] 0.0
          %297 = vst [vmem:[#allocation2 + $0x50] sm:$0xff] 0.0
          %298 = vst [vmem:[#allocation2 + $0x58] sm:$0xff] 0.0
        $region52: #{tpu_custom_call.1} parent=35 // pred_fallthru
          _
        %v299 = vld [vmem:[#allocation2] sm:$0xff]
        %v300 = vld [vmem:[#allocation2 + $0x8] sm:$0xff]
        %v301 = vld [vmem:[#allocation2 + $0x10] sm:$0xff]
        %v302 = vld [vmem:[#allocation2 + $0x18] sm:$0xff]
        %v303 = vld [vmem:[#allocation2 + $0x20] sm:$0xff]
        %v304 = vld [vmem:[#allocation2 + $0x28] sm:$0xff]
        %v305 = vld [vmem:[#allocation2 + $0x30] sm:$0xff]
        %v306 = vld [vmem:[#allocation2 + $0x38] sm:$0xff]
        %v307 = vld [vmem:[#allocation2 + $0x40] sm:$0xff]
        %v308 = vld [vmem:[#allocation2 + $0x48] sm:$0xff]
        %v309 = vld [vmem:[#allocation2 + $0x50] sm:$0xff]
        %v310 = vld [vmem:[#allocation2 + $0x58] sm:$0xff]
        %v311 = vld [vmem:[%s242] sm:$0xff]
        %v312 = vld [vmem:[%s242 + $0x8] sm:$0xff]
        %v313 = vld [vmem:[%s242 + $0x10] sm:$0xff]
        %v314 = vld [vmem:[%s242 + $0x18] sm:$0xff]
        %v315 = vld [vmem:[%s242 + $0x20] sm:$0xff]
        %v316 = vld [vmem:[%s242 + $0x28] sm:$0xff]
        %v317 = vld [vmem:[%s242 + $0x30] sm:$0xff]
        %v318 = vld [vmem:[%s242 + $0x38] sm:$0xff]
        %v319 = vpack.c.bf16 %v315, %v311
        %v320 = vpack.c.bf16 %v316, %v312
        %v321 = vpack.c.bf16 %v317, %v313
        %v322 = vpack.c.bf16 %v318, %v314
        %v323 = vld [vmem:[%s251] sm:$0xff]
        %v324 = vld [vmem:[%s251 + $0x8] sm:$0xff]
        %v325 = vld [vmem:[%s251 + $0x10] sm:$0xff]
        %v326 = vld [vmem:[%s251 + $0x18] sm:$0xff]
        %v327 = vld [vmem:[%s251 + $0x20] sm:$0xff]
        %v328 = vld [vmem:[%s251 + $0x28] sm:$0xff]
        %v329 = vld [vmem:[%s251 + $0x30] sm:$0xff]
        %v330 = vld [vmem:[%s251 + $0x38] sm:$0xff]
        %v331 = vld [vmem:[%s251 + $0x40] sm:$0xff]
        %v332 = vld [vmem:[%s251 + $0x48] sm:$0xff]
        %v333 = vld [vmem:[%s251 + $0x50] sm:$0xff]
        %v334 = vld [vmem:[%s251 + $0x58] sm:$0xff]
        %v335 = vld [vmem:[%s251 + $0x60] sm:$0xff]
        %v336 = vld [vmem:[%s251 + $0x68] sm:$0xff]
        %v337 = vld [vmem:[%s251 + $0x70] sm:$0xff]
        %v338 = vld [vmem:[%s251 + $0x78] sm:$0xff]
        %v339 = vld [vmem:[%s251 + $0x80] sm:$0xff]
        %v340 = vld [vmem:[%s251 + $0x88] sm:$0xff]
        %v341 = vld [vmem:[%s251 + $0x90] sm:$0xff]
        %v342 = vld [vmem:[%s251 + $0x98] sm:$0xff]
        %v343 = vld [vmem:[%s251 + $0xa0] sm:$0xff]
        %v344 = vld [vmem:[%s251 + $0xa8] sm:$0xff]
        %v345 = vld [vmem:[%s251 + $0xb0] sm:$0xff]
        %v346 = vld [vmem:[%s251 + $0xb8] sm:$0xff]
        %v347 = vld [vmem:[%s251 + $0xc0] sm:$0xff]
        %v348 = vld [vmem:[%s251 + $0xc8] sm:$0xff]
        %v349 = vld [vmem:[%s251 + $0xd0] sm:$0xff]
        %v350 = vld [vmem:[%s251 + $0xd8] sm:$0xff]
        %v351 = vld [vmem:[%s251 + $0xe0] sm:$0xff]
        %v352 = vld [vmem:[%s251 + $0xe8] sm:$0xff]
        %v353 = vld [vmem:[%s251 + $0xf0] sm:$0xff]
        %v354 = vld [vmem:[%s251 + $0xf8] sm:$0xff]
        %v355 = vld [vmem:[%s251 + $0x100] sm:$0xff]
        %v356 = vld [vmem:[%s251 + $0x108] sm:$0xff]
        %v357 = vld [vmem:[%s251 + $0x110] sm:$0xff]
        %v358 = vld [vmem:[%s251 + $0x118] sm:$0xff]
        %v359 = vld [vmem:[%s251 + $0x120] sm:$0xff]
        %v360 = vld [vmem:[%s251 + $0x128] sm:$0xff]
        %v361 = vld [vmem:[%s251 + $0x130] sm:$0xff]
        %v362 = vld [vmem:[%s251 + $0x138] sm:$0xff]
        %v363 = vld [vmem:[%s251 + $0x140] sm:$0xff]
        %v364 = vld [vmem:[%s251 + $0x148] sm:$0xff]
        %v365 = vld [vmem:[%s251 + $0x150] sm:$0xff]
        %v366 = vld [vmem:[%s251 + $0x158] sm:$0xff]
        %v367 = vld [vmem:[%s251 + $0x160] sm:$0xff]
        %v368 = vld [vmem:[%s251 + $0x168] sm:$0xff]
        %v369 = vld [vmem:[%s251 + $0x170] sm:$0xff]
        %v370 = vld [vmem:[%s251 + $0x178] sm:$0xff]
        %v371 = vld [vmem:[%s251 + $0x180] sm:$0xff]
        %v372 = vld [vmem:[%s251 + $0x188] sm:$0xff]
        %v373 = vld [vmem:[%s251 + $0x190] sm:$0xff]
        %v374 = vld [vmem:[%s251 + $0x198] sm:$0xff]
        %v375 = vld [vmem:[%s251 + $0x1a0] sm:$0xff]
        %v376 = vld [vmem:[%s251 + $0x1a8] sm:$0xff]
        %v377 = vld [vmem:[%s251 + $0x1b0] sm:$0xff]
        %v378 = vld [vmem:[%s251 + $0x1b8] sm:$0xff]
        %v379 = vld [vmem:[%s251 + $0x1c0] sm:$0xff]
        %v380 = vld [vmem:[%s251 + $0x1c8] sm:$0xff]
        %v381 = vld [vmem:[%s251 + $0x1d0] sm:$0xff]
        %v382 = vld [vmem:[%s251 + $0x1d8] sm:$0xff]
        %v383 = vld [vmem:[%s251 + $0x1e0] sm:$0xff]
        %v384 = vld [vmem:[%s251 + $0x1e8] sm:$0xff]
        %v385 = vld [vmem:[%s251 + $0x1f0] sm:$0xff]
        %v386 = vld [vmem:[%s251 + $0x1f8] sm:$0xff]
        %v387 = vld [vmem:[%s251 + $0x200] sm:$0xff]
        %v388 = vld [vmem:[%s251 + $0x208] sm:$0xff]
        %v389 = vld [vmem:[%s251 + $0x210] sm:$0xff]
        %v390 = vld [vmem:[%s251 + $0x218] sm:$0xff]
        %v391 = vld [vmem:[%s251 + $0x220] sm:$0xff]
        %v392 = vld [vmem:[%s251 + $0x228] sm:$0xff]
        %v393 = vld [vmem:[%s251 + $0x230] sm:$0xff]
        %v394 = vld [vmem:[%s251 + $0x238] sm:$0xff]
        %v395 = vld [vmem:[%s251 + $0x240] sm:$0xff]
        %v396 = vld [vmem:[%s251 + $0x248] sm:$0xff]
        %v397 = vld [vmem:[%s251 + $0x250] sm:$0xff]
        %v398 = vld [vmem:[%s251 + $0x258] sm:$0xff]
        %v399 = vld [vmem:[%s251 + $0x260] sm:$0xff]
        %v400 = vld [vmem:[%s251 + $0x268] sm:$0xff]
        %v401 = vld [vmem:[%s251 + $0x270] sm:$0xff]
        %v402 = vld [vmem:[%s251 + $0x278] sm:$0xff]
        %v403 = vld [vmem:[%s251 + $0x280] sm:$0xff]
        %v404 = vld [vmem:[%s251 + $0x288] sm:$0xff]
        %v405 = vld [vmem:[%s251 + $0x290] sm:$0xff]
        %v406 = vld [vmem:[%s251 + $0x298] sm:$0xff]
        %v407 = vld [vmem:[%s251 + $0x2a0] sm:$0xff]
        %v408 = vld [vmem:[%s251 + $0x2a8] sm:$0xff]
        %v409 = vld [vmem:[%s251 + $0x2b0] sm:$0xff]
        %v410 = vld [vmem:[%s251 + $0x2b8] sm:$0xff]
        %v411 = vld [vmem:[%s251 + $0x2c0] sm:$0xff]
        %v412 = vld [vmem:[%s251 + $0x2c8] sm:$0xff]
        %v413 = vld [vmem:[%s251 + $0x2d0] sm:$0xff]
        %v414 = vld [vmem:[%s251 + $0x2d8] sm:$0xff]
        %v415 = vld [vmem:[%s251 + $0x2e0] sm:$0xff]
        %v416 = vld [vmem:[%s251 + $0x2e8] sm:$0xff]
        %v417 = vld [vmem:[%s251 + $0x2f0] sm:$0xff]
        %v418 = vld [vmem:[%s251 + $0x2f8] sm:$0xff]
        %v419 = vld [vmem:[%s251 + $0x300] sm:$0xff]
        %v420 = vld [vmem:[%s251 + $0x308] sm:$0xff]
        %v421 = vld [vmem:[%s251 + $0x310] sm:$0xff]
        %v422 = vld [vmem:[%s251 + $0x318] sm:$0xff]
        %v423 = vld [vmem:[%s251 + $0x320] sm:$0xff]
        %v424 = vld [vmem:[%s251 + $0x328] sm:$0xff]
        %v425 = vld [vmem:[%s251 + $0x330] sm:$0xff]
        %v426 = vld [vmem:[%s251 + $0x338] sm:$0xff]
        %v427 = vld [vmem:[%s251 + $0x340] sm:$0xff]
        %v428 = vld [vmem:[%s251 + $0x348] sm:$0xff]
        %v429 = vld [vmem:[%s251 + $0x350] sm:$0xff]
        %v430 = vld [vmem:[%s251 + $0x358] sm:$0xff]
        %v431 = vld [vmem:[%s251 + $0x360] sm:$0xff]
        %v432 = vld [vmem:[%s251 + $0x368] sm:$0xff]
        %v433 = vld [vmem:[%s251 + $0x370] sm:$0xff]
        %v434 = vld [vmem:[%s251 + $0x378] sm:$0xff]
        %v435 = vld [vmem:[%s251 + $0x380] sm:$0xff]
        %v436 = vld [vmem:[%s251 + $0x388] sm:$0xff]
        %v437 = vld [vmem:[%s251 + $0x390] sm:$0xff]
        %v438 = vld [vmem:[%s251 + $0x398] sm:$0xff]
        %v439 = vld [vmem:[%s251 + $0x3a0] sm:$0xff]
        %v440 = vld [vmem:[%s251 + $0x3a8] sm:$0xff]
        %v441 = vld [vmem:[%s251 + $0x3b0] sm:$0xff]
        %v442 = vld [vmem:[%s251 + $0x3b8] sm:$0xff]
        %v443 = vld [vmem:[%s251 + $0x3c0] sm:$0xff]
        %v444 = vld [vmem:[%s251 + $0x3c8] sm:$0xff]
        %v445 = vld [vmem:[%s251 + $0x3d0] sm:$0xff]
        %v446 = vld [vmem:[%s251 + $0x3d8] sm:$0xff]
        %v447 = vld [vmem:[%s251 + $0x3e0] sm:$0xff]
        %v448 = vld [vmem:[%s251 + $0x3e8] sm:$0xff]
        %v449 = vld [vmem:[%s251 + $0x3f0] sm:$0xff]
        %v450 = vld [vmem:[%s251 + $0x3f8] sm:$0xff]
        %v451 = vld [vmem:[%s251 + $0x400] sm:$0xff]
        %v452 = vld [vmem:[%s251 + $0x408] sm:$0xff]
        %v453 = vld [vmem:[%s251 + $0x410] sm:$0xff]
        %v454 = vld [vmem:[%s251 + $0x418] sm:$0xff]
        %v455 = vld [vmem:[%s251 + $0x420] sm:$0xff]
        %v456 = vld [vmem:[%s251 + $0x428] sm:$0xff]
        %v457 = vld [vmem:[%s251 + $0x430] sm:$0xff]
        %v458 = vld [vmem:[%s251 + $0x438] sm:$0xff]
        %v459 = vld [vmem:[%s251 + $0x440] sm:$0xff]
        %v460 = vld [vmem:[%s251 + $0x448] sm:$0xff]
        %v461 = vld [vmem:[%s251 + $0x450] sm:$0xff]
        %v462 = vld [vmem:[%s251 + $0x458] sm:$0xff]
        %v463 = vld [vmem:[%s251 + $0x460] sm:$0xff]
        %v464 = vld [vmem:[%s251 + $0x468] sm:$0xff]
        %v465 = vld [vmem:[%s251 + $0x470] sm:$0xff]
        %v466 = vld [vmem:[%s251 + $0x478] sm:$0xff]
        %v467 = vld [vmem:[%s251 + $0x480] sm:$0xff]
        %v468 = vld [vmem:[%s251 + $0x488] sm:$0xff]
        %v469 = vld [vmem:[%s251 + $0x490] sm:$0xff]
        %v470 = vld [vmem:[%s251 + $0x498] sm:$0xff]
        %v471 = vld [vmem:[%s251 + $0x4a0] sm:$0xff]
        %v472 = vld [vmem:[%s251 + $0x4a8] sm:$0xff]
        %v473 = vld [vmem:[%s251 + $0x4b0] sm:$0xff]
        %v474 = vld [vmem:[%s251 + $0x4b8] sm:$0xff]
        %v475 = vld [vmem:[%s251 + $0x4c0] sm:$0xff]
        %v476 = vld [vmem:[%s251 + $0x4c8] sm:$0xff]
        %v477 = vld [vmem:[%s251 + $0x4d0] sm:$0xff]
        %v478 = vld [vmem:[%s251 + $0x4d8] sm:$0xff]
        %v479 = vld [vmem:[%s251 + $0x4e0] sm:$0xff]
        %v480 = vld [vmem:[%s251 + $0x4e8] sm:$0xff]
        %v481 = vld [vmem:[%s251 + $0x4f0] sm:$0xff]
        %v482 = vld [vmem:[%s251 + $0x4f8] sm:$0xff]
        %v483 = vld [vmem:[%s251 + $0x500] sm:$0xff]
        %v484 = vld [vmem:[%s251 + $0x508] sm:$0xff]
        %v485 = vld [vmem:[%s251 + $0x510] sm:$0xff]
        %v486 = vld [vmem:[%s251 + $0x518] sm:$0xff]
        %v487 = vld [vmem:[%s251 + $0x520] sm:$0xff]
        %v488 = vld [vmem:[%s251 + $0x528] sm:$0xff]
        %v489 = vld [vmem:[%s251 + $0x530] sm:$0xff]
        %v490 = vld [vmem:[%s251 + $0x538] sm:$0xff]
        %v491 = vld [vmem:[%s251 + $0x540] sm:$0xff]
        %v492 = vld [vmem:[%s251 + $0x548] sm:$0xff]
        %v493 = vld [vmem:[%s251 + $0x550] sm:$0xff]
        %v494 = vld [vmem:[%s251 + $0x558] sm:$0xff]
        %v495 = vld [vmem:[%s251 + $0x560] sm:$0xff]
        %v496 = vld [vmem:[%s251 + $0x568] sm:$0xff]
        %v497 = vld [vmem:[%s251 + $0x570] sm:$0xff]
        %v498 = vld [vmem:[%s251 + $0x578] sm:$0xff]
        %v499 = vld [vmem:[%s251 + $0x580] sm:$0xff]
        %v500 = vld [vmem:[%s251 + $0x588] sm:$0xff]
        %v501 = vld [vmem:[%s251 + $0x590] sm:$0xff]
        %v502 = vld [vmem:[%s251 + $0x598] sm:$0xff]
        %v503 = vld [vmem:[%s251 + $0x5a0] sm:$0xff]
        %v504 = vld [vmem:[%s251 + $0x5a8] sm:$0xff]
        %v505 = vld [vmem:[%s251 + $0x5b0] sm:$0xff]
        %v506 = vld [vmem:[%s251 + $0x5b8] sm:$0xff]
        %v507 = vld [vmem:[%s251 + $0x5c0] sm:$0xff]
        %v508 = vld [vmem:[%s251 + $0x5c8] sm:$0xff]
        %v509 = vld [vmem:[%s251 + $0x5d0] sm:$0xff]
        %v510 = vld [vmem:[%s251 + $0x5d8] sm:$0xff]
        %v511 = vld [vmem:[%s251 + $0x5e0] sm:$0xff]
        %v512 = vld [vmem:[%s251 + $0x5e8] sm:$0xff]
        %v513 = vld [vmem:[%s251 + $0x5f0] sm:$0xff]
        %v514 = vld [vmem:[%s251 + $0x5f8] sm:$0xff]
        %v707 = vunpack.c.l.b16 %v323
        %v708 = vunpack.c.h.b16 %v323
        %v709 = vunpack.c.l.b16 %v324
        %v710 = vunpack.c.h.b16 %v324
        %v711 = vunpack.c.l.b16 %v325
        %v712 = vunpack.c.h.b16 %v325
        %v713 = vunpack.c.l.b16 %v326
        %v714 = vunpack.c.h.b16 %v326
        %v715 = vunpack.c.l.b16 %v327
        %v716 = vunpack.c.h.b16 %v327
        %v717 = vunpack.c.l.b16 %v328
        %v718 = vunpack.c.h.b16 %v328
        %v719 = vunpack.c.l.b16 %v329
        %v720 = vunpack.c.h.b16 %v329
        %v721 = vunpack.c.l.b16 %v330
        %v722 = vunpack.c.h.b16 %v330
        %v723 = vunpack.c.l.b16 %v331
        %v724 = vunpack.c.h.b16 %v331
        %v725 = vunpack.c.l.b16 %v332
        %v726 = vunpack.c.h.b16 %v332
        %v727 = vunpack.c.l.b16 %v333
        %v728 = vunpack.c.h.b16 %v333
        %v729 = vunpack.c.l.b16 %v334
        %v730 = vunpack.c.h.b16 %v334
        %v731 = vunpack.c.l.b16 %v335
        %v732 = vunpack.c.h.b16 %v335
        %v733 = vunpack.c.l.b16 %v336
        %v734 = vunpack.c.h.b16 %v336
        %v735 = vunpack.c.l.b16 %v337
        %v736 = vunpack.c.h.b16 %v337
        %v737 = vunpack.c.l.b16 %v338
        %v738 = vunpack.c.h.b16 %v338
        %v739 = vunpack.c.l.b16 %v339
        %v740 = vunpack.c.h.b16 %v339
        %v741 = vunpack.c.l.b16 %v340
        %v742 = vunpack.c.h.b16 %v340
        %v743 = vunpack.c.l.b16 %v341
        %v744 = vunpack.c.h.b16 %v341
        %v745 = vunpack.c.l.b16 %v342
        %v746 = vunpack.c.h.b16 %v342
        %v747 = vunpack.c.l.b16 %v343
        %v748 = vunpack.c.h.b16 %v343
        %v749 = vunpack.c.l.b16 %v344
        %v750 = vunpack.c.h.b16 %v344
        %v751 = vunpack.c.l.b16 %v345
        %v752 = vunpack.c.h.b16 %v345
        %v753 = vunpack.c.l.b16 %v346
        %v754 = vunpack.c.h.b16 %v346
        %v755 = vunpack.c.l.b16 %v347
        %v756 = vunpack.c.h.b16 %v347
        %v757 = vunpack.c.l.b16 %v348
        %v758 = vunpack.c.h.b16 %v348
        %v759 = vunpack.c.l.b16 %v349
        %v760 = vunpack.c.h.b16 %v349
        %v761 = vunpack.c.l.b16 %v350
        %v762 = vunpack.c.h.b16 %v350
        %v763 = vunpack.c.l.b16 %v351
        %v764 = vunpack.c.h.b16 %v351
        %v765 = vunpack.c.l.b16 %v352
        %v766 = vunpack.c.h.b16 %v352
        %v767 = vunpack.c.l.b16 %v353
        %v768 = vunpack.c.h.b16 %v353
        %v769 = vunpack.c.l.b16 %v354
        %v770 = vunpack.c.h.b16 %v354
        %v771 = vunpack.c.l.b16 %v355
        %v772 = vunpack.c.h.b16 %v355
        %v773 = vunpack.c.l.b16 %v356
        %v774 = vunpack.c.h.b16 %v356
        %v775 = vunpack.c.l.b16 %v357
        %v776 = vunpack.c.h.b16 %v357
        %v777 = vunpack.c.l.b16 %v358
        %v778 = vunpack.c.h.b16 %v358
        %v779 = vunpack.c.l.b16 %v359
        %v780 = vunpack.c.h.b16 %v359
        %v781 = vunpack.c.l.b16 %v360
        %v782 = vunpack.c.h.b16 %v360
        %v783 = vunpack.c.l.b16 %v361
        %v784 = vunpack.c.h.b16 %v361
        %v785 = vunpack.c.l.b16 %v362
        %v786 = vunpack.c.h.b16 %v362
        %v787 = vunpack.c.l.b16 %v363
        %v788 = vunpack.c.h.b16 %v363
        %v789 = vunpack.c.l.b16 %v364
        %v790 = vunpack.c.h.b16 %v364
        %v791 = vunpack.c.l.b16 %v365
        %v792 = vunpack.c.h.b16 %v365
        %v793 = vunpack.c.l.b16 %v366
        %v794 = vunpack.c.h.b16 %v366
        %v795 = vunpack.c.l.b16 %v367
        %v796 = vunpack.c.h.b16 %v367
        %v797 = vunpack.c.l.b16 %v368
        %v798 = vunpack.c.h.b16 %v368
        %v799 = vunpack.c.l.b16 %v369
        %v800 = vunpack.c.h.b16 %v369
        %v801 = vunpack.c.l.b16 %v370
        %v802 = vunpack.c.h.b16 %v370
        %v803 = vunpack.c.l.b16 %v371
        %v804 = vunpack.c.h.b16 %v371
        %v805 = vunpack.c.l.b16 %v372
        %v806 = vunpack.c.h.b16 %v372
        %v807 = vunpack.c.l.b16 %v373
        %v808 = vunpack.c.h.b16 %v373
        %v809 = vunpack.c.l.b16 %v374
        %v810 = vunpack.c.h.b16 %v374
        %v811 = vunpack.c.l.b16 %v375
        %v812 = vunpack.c.h.b16 %v375
        %v813 = vunpack.c.l.b16 %v376
        %v814 = vunpack.c.h.b16 %v376
        %v815 = vunpack.c.l.b16 %v377
        %v816 = vunpack.c.h.b16 %v377
        %v817 = vunpack.c.l.b16 %v378
        %v818 = vunpack.c.h.b16 %v378
        %v819 = vunpack.c.l.b16 %v379
        %v820 = vunpack.c.h.b16 %v379
        %v821 = vunpack.c.l.b16 %v380
        %v822 = vunpack.c.h.b16 %v380
        %v823 = vunpack.c.l.b16 %v381
        %v824 = vunpack.c.h.b16 %v381
        %v825 = vunpack.c.l.b16 %v382
        %v826 = vunpack.c.h.b16 %v382
        %v827 = vunpack.c.l.b16 %v383
        %v828 = vunpack.c.h.b16 %v383
        %v829 = vunpack.c.l.b16 %v384
        %v830 = vunpack.c.h.b16 %v384
        %v831 = vunpack.c.l.b16 %v385
        %v832 = vunpack.c.h.b16 %v385
        %v833 = vunpack.c.l.b16 %v386
        %v834 = vunpack.c.h.b16 %v386
        %v835 = vunpack.c.l.b16 %v387
        %v836 = vunpack.c.h.b16 %v387
        %v837 = vunpack.c.l.b16 %v388
        %v838 = vunpack.c.h.b16 %v388
        %v839 = vunpack.c.l.b16 %v389
        %v840 = vunpack.c.h.b16 %v389
        %v841 = vunpack.c.l.b16 %v390
        %v842 = vunpack.c.h.b16 %v390
        %v843 = vunpack.c.l.b16 %v391
        %v844 = vunpack.c.h.b16 %v391
        %v845 = vunpack.c.l.b16 %v392
        %v846 = vunpack.c.h.b16 %v392
        %v847 = vunpack.c.l.b16 %v393
        %v848 = vunpack.c.h.b16 %v393
        %v849 = vunpack.c.l.b16 %v394
        %v850 = vunpack.c.h.b16 %v394
        %v851 = vunpack.c.l.b16 %v395
        %v852 = vunpack.c.h.b16 %v395
        %v853 = vunpack.c.l.b16 %v396
        %v854 = vunpack.c.h.b16 %v396
        %v855 = vunpack.c.l.b16 %v397
        %v856 = vunpack.c.h.b16 %v397
        %v857 = vunpack.c.l.b16 %v398
        %v858 = vunpack.c.h.b16 %v398
        %v859 = vunpack.c.l.b16 %v399
        %v860 = vunpack.c.h.b16 %v399
        %v861 = vunpack.c.l.b16 %v400
        %v862 = vunpack.c.h.b16 %v400
        %v863 = vunpack.c.l.b16 %v401
        %v864 = vunpack.c.h.b16 %v401
        %v865 = vunpack.c.l.b16 %v402
        %v866 = vunpack.c.h.b16 %v402
        %v867 = vunpack.c.l.b16 %v403
        %v868 = vunpack.c.h.b16 %v403
        %v869 = vunpack.c.l.b16 %v404
        %v870 = vunpack.c.h.b16 %v404
        %v871 = vunpack.c.l.b16 %v405
        %v872 = vunpack.c.h.b16 %v405
        %v873 = vunpack.c.l.b16 %v406
        %v874 = vunpack.c.h.b16 %v406
        %v875 = vunpack.c.l.b16 %v407
        %v876 = vunpack.c.h.b16 %v407
        %v877 = vunpack.c.l.b16 %v408
        %v878 = vunpack.c.h.b16 %v408
        %v879 = vunpack.c.l.b16 %v409
        %v880 = vunpack.c.h.b16 %v409
        %v881 = vunpack.c.l.b16 %v410
        %v882 = vunpack.c.h.b16 %v410
        %v883 = vunpack.c.l.b16 %v411
        %v884 = vunpack.c.h.b16 %v411
        %v885 = vunpack.c.l.b16 %v412
        %v886 = vunpack.c.h.b16 %v412
        %v887 = vunpack.c.l.b16 %v413
        %v888 = vunpack.c.h.b16 %v413
        %v889 = vunpack.c.l.b16 %v414
        %v890 = vunpack.c.h.b16 %v414
        %v891 = vunpack.c.l.b16 %v415
        %v892 = vunpack.c.h.b16 %v415
        %v893 = vunpack.c.l.b16 %v416
        %v894 = vunpack.c.h.b16 %v416
        %v895 = vunpack.c.l.b16 %v417
        %v896 = vunpack.c.h.b16 %v417
        %v897 = vunpack.c.l.b16 %v418
        %v898 = vunpack.c.h.b16 %v418
        %v899 = vunpack.c.l.b16 %v419
        %v900 = vunpack.c.h.b16 %v419
        %v901 = vunpack.c.l.b16 %v420
        %v902 = vunpack.c.h.b16 %v420
        %v903 = vunpack.c.l.b16 %v421
        %v904 = vunpack.c.h.b16 %v421
        %v905 = vunpack.c.l.b16 %v422
        %v906 = vunpack.c.h.b16 %v422
        %v907 = vunpack.c.l.b16 %v423
        %v908 = vunpack.c.h.b16 %v423
        %v909 = vunpack.c.l.b16 %v424
        %v910 = vunpack.c.h.b16 %v424
        %v911 = vunpack.c.l.b16 %v425
        %v912 = vunpack.c.h.b16 %v425
        %v913 = vunpack.c.l.b16 %v426
        %v914 = vunpack.c.h.b16 %v426
        %v915 = vunpack.c.l.b16 %v427
        %v916 = vunpack.c.h.b16 %v427
        %v917 = vunpack.c.l.b16 %v428
        %v918 = vunpack.c.h.b16 %v428
        %v919 = vunpack.c.l.b16 %v429
        %v920 = vunpack.c.h.b16 %v429
        %v921 = vunpack.c.l.b16 %v430
        %v922 = vunpack.c.h.b16 %v430
        %v923 = vunpack.c.l.b16 %v431
        %v924 = vunpack.c.h.b16 %v431
        %v925 = vunpack.c.l.b16 %v432
        %v926 = vunpack.c.h.b16 %v432
        %v927 = vunpack.c.l.b16 %v433
        %v928 = vunpack.c.h.b16 %v433
        %v929 = vunpack.c.l.b16 %v434
        %v930 = vunpack.c.h.b16 %v434
        %v931 = vunpack.c.l.b16 %v435
        %v932 = vunpack.c.h.b16 %v435
        %v933 = vunpack.c.l.b16 %v436
        %v934 = vunpack.c.h.b16 %v436
        %v935 = vunpack.c.l.b16 %v437
        %v936 = vunpack.c.h.b16 %v437
        %v937 = vunpack.c.l.b16 %v438
        %v938 = vunpack.c.h.b16 %v438
        %v939 = vunpack.c.l.b16 %v439
        %v940 = vunpack.c.h.b16 %v439
        %v941 = vunpack.c.l.b16 %v440
        %v942 = vunpack.c.h.b16 %v440
        %v943 = vunpack.c.l.b16 %v441
        %v944 = vunpack.c.h.b16 %v441
        %v945 = vunpack.c.l.b16 %v442
        %v946 = vunpack.c.h.b16 %v442
        %v947 = vunpack.c.l.b16 %v443
        %v948 = vunpack.c.h.b16 %v443
        %v949 = vunpack.c.l.b16 %v444
        %v950 = vunpack.c.h.b16 %v444
        %v951 = vunpack.c.l.b16 %v445
        %v952 = vunpack.c.h.b16 %v445
        %v953 = vunpack.c.l.b16 %v446
        %v954 = vunpack.c.h.b16 %v446
        %v955 = vunpack.c.l.b16 %v447
        %v956 = vunpack.c.h.b16 %v447
        %v957 = vunpack.c.l.b16 %v448
        %v958 = vunpack.c.h.b16 %v448
        %v959 = vunpack.c.l.b16 %v449
        %v960 = vunpack.c.h.b16 %v449
        %v961 = vunpack.c.l.b16 %v450
        %v962 = vunpack.c.h.b16 %v450
        %v963 = vunpack.c.l.b16 %v451
        %v964 = vunpack.c.h.b16 %v451
        %v965 = vunpack.c.l.b16 %v452
        %v966 = vunpack.c.h.b16 %v452
        %v967 = vunpack.c.l.b16 %v453
        %v968 = vunpack.c.h.b16 %v453
        %v969 = vunpack.c.l.b16 %v454
        %v970 = vunpack.c.h.b16 %v454
        %v971 = vunpack.c.l.b16 %v455
        %v972 = vunpack.c.h.b16 %v455
        %v973 = vunpack.c.l.b16 %v456
        %v974 = vunpack.c.h.b16 %v456
        %v975 = vunpack.c.l.b16 %v457
        %v976 = vunpack.c.h.b16 %v457
        %v977 = vunpack.c.l.b16 %v458
        %v978 = vunpack.c.h.b16 %v458
        %v979 = vunpack.c.l.b16 %v459
        %v980 = vunpack.c.h.b16 %v459
        %v981 = vunpack.c.l.b16 %v460
        %v982 = vunpack.c.h.b16 %v460
        %v983 = vunpack.c.l.b16 %v461
        %v984 = vunpack.c.h.b16 %v461
        %v985 = vunpack.c.l.b16 %v462
        %v986 = vunpack.c.h.b16 %v462
        %v987 = vunpack.c.l.b16 %v463
        %v988 = vunpack.c.h.b16 %v463
        %v989 = vunpack.c.l.b16 %v464
        %v990 = vunpack.c.h.b16 %v464
        %v991 = vunpack.c.l.b16 %v465
        %v992 = vunpack.c.h.b16 %v465
        %v993 = vunpack.c.l.b16 %v466
        %v994 = vunpack.c.h.b16 %v466
        %v995 = vunpack.c.l.b16 %v467
        %v996 = vunpack.c.h.b16 %v467
        %v997 = vunpack.c.l.b16 %v468
        %v998 = vunpack.c.h.b16 %v468
        %v999 = vunpack.c.l.b16 %v469
        %v1000 = vunpack.c.h.b16 %v469
        %v1001 = vunpack.c.l.b16 %v470
        %v1002 = vunpack.c.h.b16 %v470
        %v1003 = vunpack.c.l.b16 %v471
        %v1004 = vunpack.c.h.b16 %v471
        %v1005 = vunpack.c.l.b16 %v472
        %v1006 = vunpack.c.h.b16 %v472
        %v1007 = vunpack.c.l.b16 %v473
        %v1008 = vunpack.c.h.b16 %v473
        %v1009 = vunpack.c.l.b16 %v474
        %v1010 = vunpack.c.h.b16 %v474
        %v1011 = vunpack.c.l.b16 %v475
        %v1012 = vunpack.c.h.b16 %v475
        %v1013 = vunpack.c.l.b16 %v476
        %v1014 = vunpack.c.h.b16 %v476
        %v1015 = vunpack.c.l.b16 %v477
        %v1016 = vunpack.c.h.b16 %v477
        %v1017 = vunpack.c.l.b16 %v478
        %v1018 = vunpack.c.h.b16 %v478
        %v1019 = vunpack.c.l.b16 %v479
        %v1020 = vunpack.c.h.b16 %v479
        %v1021 = vunpack.c.l.b16 %v480
        %v1022 = vunpack.c.h.b16 %v480
        %v1023 = vunpack.c.l.b16 %v481
        %v1024 = vunpack.c.h.b16 %v481
        %v1025 = vunpack.c.l.b16 %v482
        %v1026 = vunpack.c.h.b16 %v482
        %v1027 = vunpack.c.l.b16 %v483
        %v1028 = vunpack.c.h.b16 %v483
        %v1029 = vunpack.c.l.b16 %v484
        %v1030 = vunpack.c.h.b16 %v484
        %v1031 = vunpack.c.l.b16 %v485
        %v1032 = vunpack.c.h.b16 %v485
        %v1033 = vunpack.c.l.b16 %v486
        %v1034 = vunpack.c.h.b16 %v486
        %v1035 = vunpack.c.l.b16 %v487
        %v1036 = vunpack.c.h.b16 %v487
        %v1037 = vunpack.c.l.b16 %v488
        %v1038 = vunpack.c.h.b16 %v488
        %v1039 = vunpack.c.l.b16 %v489
        %v1040 = vunpack.c.h.b16 %v489
        %v1041 = vunpack.c.l.b16 %v490
        %v1042 = vunpack.c.h.b16 %v490
        %v1043 = vunpack.c.l.b16 %v491
        %v1044 = vunpack.c.h.b16 %v491
        %v1045 = vunpack.c.l.b16 %v492
        %v1046 = vunpack.c.h.b16 %v492
        %v1047 = vunpack.c.l.b16 %v493
        %v1048 = vunpack.c.h.b16 %v493
        %v1049 = vunpack.c.l.b16 %v494
        %v1050 = vunpack.c.h.b16 %v494
        %v1051 = vunpack.c.l.b16 %v495
        %v1052 = vunpack.c.h.b16 %v495
        %v1053 = vunpack.c.l.b16 %v496
        %v1054 = vunpack.c.h.b16 %v496
        %v1055 = vunpack.c.l.b16 %v497
        %v1056 = vunpack.c.h.b16 %v497
        %v1057 = vunpack.c.l.b16 %v498
        %v1058 = vunpack.c.h.b16 %v498
        %v1059 = vunpack.c.l.b16 %v499
        %v1060 = vunpack.c.h.b16 %v499
        %v1061 = vunpack.c.l.b16 %v500
        %v1062 = vunpack.c.h.b16 %v500
        %v1063 = vunpack.c.l.b16 %v501
        %v1064 = vunpack.c.h.b16 %v501
        %v1065 = vunpack.c.l.b16 %v502
        %v1066 = vunpack.c.h.b16 %v502
        %v1067 = vunpack.c.l.b16 %v503
        %v1068 = vunpack.c.h.b16 %v503
        %v1069 = vunpack.c.l.b16 %v504
        %v1070 = vunpack.c.h.b16 %v504
        %v1071 = vunpack.c.l.b16 %v505
        %v1072 = vunpack.c.h.b16 %v505
        %v1073 = vunpack.c.l.b16 %v506
        %v1074 = vunpack.c.h.b16 %v506
        %v1075 = vunpack.c.l.b16 %v507
        %v1076 = vunpack.c.h.b16 %v507
        %v1077 = vunpack.c.l.b16 %v508
        %v1078 = vunpack.c.h.b16 %v508
        %v1079 = vunpack.c.l.b16 %v509
        %v1080 = vunpack.c.h.b16 %v509
        %v1081 = vunpack.c.l.b16 %v510
        %v1082 = vunpack.c.h.b16 %v510
        %v1083 = vunpack.c.l.b16 %v511
        %v1084 = vunpack.c.h.b16 %v511
        %v1085 = vunpack.c.l.b16 %v512
        %v1086 = vunpack.c.h.b16 %v512
        %v1087 = vunpack.c.l.b16 %v513
        %v1088 = vunpack.c.h.b16 %v513
        %v1089 = vunpack.c.l.b16 %v514
        %v1090 = vunpack.c.h.b16 %v514
        %v1091 = vpack.c.b16 %v713, %v707
        %v1092 = vpack.c.b16 %v714, %v708
        %v1093 = vpack.c.b16 %v715, %v709
        %v1094 = vpack.c.b16 %v716, %v710
        %v1095 = vpack.c.b16 %v717, %v711
        %v1096 = vpack.c.b16 %v718, %v712
        %v1097 = vpack.c.b16 %v725, %v719
        %v1098 = vpack.c.b16 %v726, %v720
        %v1099 = vpack.c.b16 %v727, %v721
        %v1100 = vpack.c.b16 %v728, %v722
        %v1101 = vpack.c.b16 %v729, %v723
        %v1102 = vpack.c.b16 %v730, %v724
        %v1103 = vpack.c.b16 %v737, %v731
        %v1104 = vpack.c.b16 %v738, %v732
        %v1105 = vpack.c.b16 %v739, %v733
        %v1106 = vpack.c.b16 %v740, %v734
        %v1107 = vpack.c.b16 %v741, %v735
        %v1108 = vpack.c.b16 %v742, %v736
        %v1109 = vpack.c.b16 %v749, %v743
        %v1110 = vpack.c.b16 %v750, %v744
        %v1111 = vpack.c.b16 %v751, %v745
        %v1112 = vpack.c.b16 %v752, %v746
        %v1113 = vpack.c.b16 %v753, %v747
        %v1114 = vpack.c.b16 %v754, %v748
        %v1115 = vpack.c.b16 %v761, %v755
        %v1116 = vpack.c.b16 %v762, %v756
        %v1117 = vpack.c.b16 %v763, %v757
        %v1118 = vpack.c.b16 %v764, %v758
        %v1119 = vpack.c.b16 %v765, %v759
        %v1120 = vpack.c.b16 %v766, %v760
        %v1121 = vpack.c.b16 %v773, %v767
        %v1122 = vpack.c.b16 %v774, %v768
        %v1123 = vpack.c.b16 %v775, %v769
        %v1124 = vpack.c.b16 %v776, %v770
        %v1125 = vpack.c.b16 %v777, %v771
        %v1126 = vpack.c.b16 %v778, %v772
        %v1127 = vpack.c.b16 %v785, %v779
        %v1128 = vpack.c.b16 %v786, %v780
        %v1129 = vpack.c.b16 %v787, %v781
        %v1130 = vpack.c.b16 %v788, %v782
        %v1131 = vpack.c.b16 %v789, %v783
        %v1132 = vpack.c.b16 %v790, %v784
        %v1133 = vpack.c.b16 %v797, %v791
        %v1134 = vpack.c.b16 %v798, %v792
        %v1135 = vpack.c.b16 %v799, %v793
        %v1136 = vpack.c.b16 %v800, %v794
        %v1137 = vpack.c.b16 %v801, %v795
        %v1138 = vpack.c.b16 %v802, %v796
        %v1139 = vpack.c.b16 %v809, %v803
        %v1140 = vpack.c.b16 %v810, %v804
        %v1141 = vpack.c.b16 %v811, %v805
        %v1142 = vpack.c.b16 %v812, %v806
        %v1143 = vpack.c.b16 %v813, %v807
        %v1144 = vpack.c.b16 %v814, %v808
        %v1145 = vpack.c.b16 %v821, %v815
        %v1146 = vpack.c.b16 %v822, %v816
        %v1147 = vpack.c.b16 %v823, %v817
        %v1148 = vpack.c.b16 %v824, %v818
        %v1149 = vpack.c.b16 %v825, %v819
        %v1150 = vpack.c.b16 %v826, %v820
        %v1151 = vpack.c.b16 %v833, %v827
        %v1152 = vpack.c.b16 %v834, %v828
        %v1153 = vpack.c.b16 %v835, %v829
        %v1154 = vpack.c.b16 %v836, %v830
        %v1155 = vpack.c.b16 %v837, %v831
        %v1156 = vpack.c.b16 %v838, %v832
        %v1157 = vpack.c.b16 %v845, %v839
        %v1158 = vpack.c.b16 %v846, %v840
        %v1159 = vpack.c.b16 %v847, %v841
        %v1160 = vpack.c.b16 %v848, %v842
        %v1161 = vpack.c.b16 %v849, %v843
        %v1162 = vpack.c.b16 %v850, %v844
        %v1163 = vpack.c.b16 %v857, %v851
        %v1164 = vpack.c.b16 %v858, %v852
        %v1165 = vpack.c.b16 %v859, %v853
        %v1166 = vpack.c.b16 %v860, %v854
        %v1167 = vpack.c.b16 %v861, %v855
        %v1168 = vpack.c.b16 %v862, %v856
        %v1169 = vpack.c.b16 %v869, %v863
        %v1170 = vpack.c.b16 %v870, %v864
        %v1171 = vpack.c.b16 %v871, %v865
        %v1172 = vpack.c.b16 %v872, %v866
        %v1173 = vpack.c.b16 %v873, %v867
        %v1174 = vpack.c.b16 %v874, %v868
        %v1175 = vpack.c.b16 %v881, %v875
        %v1176 = vpack.c.b16 %v882, %v876
        %v1177 = vpack.c.b16 %v883, %v877
        %v1178 = vpack.c.b16 %v884, %v878
        %v1179 = vpack.c.b16 %v885, %v879
        %v1180 = vpack.c.b16 %v886, %v880
        %v1181 = vpack.c.b16 %v893, %v887
        %v1182 = vpack.c.b16 %v894, %v888
        %v1183 = vpack.c.b16 %v895, %v889
        %v1184 = vpack.c.b16 %v896, %v890
        %v1185 = vpack.c.b16 %v897, %v891
        %v1186 = vpack.c.b16 %v898, %v892
        %v1187 = vpack.c.b16 %v905, %v899
        %v1188 = vpack.c.b16 %v906, %v900
        %v1189 = vpack.c.b16 %v907, %v901
        %v1190 = vpack.c.b16 %v908, %v902
        %v1191 = vpack.c.b16 %v909, %v903
        %v1192 = vpack.c.b16 %v910, %v904
        %v1193 = vpack.c.b16 %v917, %v911
        %v1194 = vpack.c.b16 %v918, %v912
        %v1195 = vpack.c.b16 %v919, %v913
        %v1196 = vpack.c.b16 %v920, %v914
        %v1197 = vpack.c.b16 %v921, %v915
        %v1198 = vpack.c.b16 %v922, %v916
        %v1199 = vpack.c.b16 %v929, %v923
        %v1200 = vpack.c.b16 %v930, %v924
        %v1201 = vpack.c.b16 %v931, %v925
        %v1202 = vpack.c.b16 %v932, %v926
        %v1203 = vpack.c.b16 %v933, %v927
        %v1204 = vpack.c.b16 %v934, %v928
        %v1205 = vpack.c.b16 %v941, %v935
        %v1206 = vpack.c.b16 %v942, %v936
        %v1207 = vpack.c.b16 %v943, %v937
        %v1208 = vpack.c.b16 %v944, %v938
        %v1209 = vpack.c.b16 %v945, %v939
        %v1210 = vpack.c.b16 %v946, %v940
        %v1211 = vpack.c.b16 %v953, %v947
        %v1212 = vpack.c.b16 %v954, %v948
        %v1213 = vpack.c.b16 %v955, %v949
        %v1214 = vpack.c.b16 %v956, %v950
        %v1215 = vpack.c.b16 %v957, %v951
        %v1216 = vpack.c.b16 %v958, %v952
        %v1217 = vpack.c.b16 %v965, %v959
        %v1218 = vpack.c.b16 %v966, %v960
        %v1219 = vpack.c.b16 %v967, %v961
        %v1220 = vpack.c.b16 %v968, %v962
        %v1221 = vpack.c.b16 %v969, %v963
        %v1222 = vpack.c.b16 %v970, %v964
        %v1223 = vpack.c.b16 %v977, %v971
        %v1224 = vpack.c.b16 %v978, %v972
        %v1225 = vpack.c.b16 %v979, %v973
        %v1226 = vpack.c.b16 %v980, %v974
        %v1227 = vpack.c.b16 %v981, %v975
        %v1228 = vpack.c.b16 %v982, %v976
        %v1229 = vpack.c.b16 %v989, %v983
        %v1230 = vpack.c.b16 %v990, %v984
        %v1231 = vpack.c.b16 %v991, %v985
        %v1232 = vpack.c.b16 %v992, %v986
        %v1233 = vpack.c.b16 %v993, %v987
        %v1234 = vpack.c.b16 %v994, %v988
        %v1235 = vpack.c.b16 %v1001, %v995
        %v1236 = vpack.c.b16 %v1002, %v996
        %v1237 = vpack.c.b16 %v1003, %v997
        %v1238 = vpack.c.b16 %v1004, %v998
        %v1239 = vpack.c.b16 %v1005, %v999
        %v1240 = vpack.c.b16 %v1006, %v1000
        %v1241 = vpack.c.b16 %v1013, %v1007
        %v1242 = vpack.c.b16 %v1014, %v1008
        %v1243 = vpack.c.b16 %v1015, %v1009
        %v1244 = vpack.c.b16 %v1016, %v1010
        %v1245 = vpack.c.b16 %v1017, %v1011
        %v1246 = vpack.c.b16 %v1018, %v1012
        %v1247 = vpack.c.b16 %v1025, %v1019
        %v1248 = vpack.c.b16 %v1026, %v1020
        %v1249 = vpack.c.b16 %v1027, %v1021
        %v1250 = vpack.c.b16 %v1028, %v1022
        %v1251 = vpack.c.b16 %v1029, %v1023
        %v1252 = vpack.c.b16 %v1030, %v1024
        %v1253 = vpack.c.b16 %v1037, %v1031
        %v1254 = vpack.c.b16 %v1038, %v1032
        %v1255 = vpack.c.b16 %v1039, %v1033
        %v1256 = vpack.c.b16 %v1040, %v1034
        %v1257 = vpack.c.b16 %v1041, %v1035
        %v1258 = vpack.c.b16 %v1042, %v1036
        %v1259 = vpack.c.b16 %v1049, %v1043
        %v1260 = vpack.c.b16 %v1050, %v1044
        %v1261 = vpack.c.b16 %v1051, %v1045
        %v1262 = vpack.c.b16 %v1052, %v1046
        %v1263 = vpack.c.b16 %v1053, %v1047
        %v1264 = vpack.c.b16 %v1054, %v1048
        %v1265 = vpack.c.b16 %v1061, %v1055
        %v1266 = vpack.c.b16 %v1062, %v1056
        %v1267 = vpack.c.b16 %v1063, %v1057
        %v1268 = vpack.c.b16 %v1064, %v1058
        %v1269 = vpack.c.b16 %v1065, %v1059
        %v1270 = vpack.c.b16 %v1066, %v1060
        %v1271 = vpack.c.b16 %v1073, %v1067
        %v1272 = vpack.c.b16 %v1074, %v1068
        %v1273 = vpack.c.b16 %v1075, %v1069
        %v1274 = vpack.c.b16 %v1076, %v1070
        %v1275 = vpack.c.b16 %v1077, %v1071
        %v1276 = vpack.c.b16 %v1078, %v1072
        %v1277 = vpack.c.b16 %v1085, %v1079
        %v1278 = vpack.c.b16 %v1086, %v1080
        %v1279 = vpack.c.b16 %v1087, %v1081
        %v1280 = vpack.c.b16 %v1088, %v1082
        %v1281 = vpack.c.b16 %v1089, %v1083
        %v1282 = vpack.c.b16 %v1090, %v1084
        %1475 = vmatprep.subr.bf16.mxu0 %v1134
        %1476 = vmatpush1.bf16.msra.mxu0 %v1133
        %1477 = vmatprep.subr.bf16.mxu0 %v1128
        %1478 = vmatpush1.bf16.msra.mxu0 %v1127
        %1479 = vmatprep.subr.bf16.mxu0 %v1122
        %1480 = vmatpush1.bf16.msra.mxu0 %v1121
        %1481 = vmatprep.subr.bf16.mxu0 %v1116
        %1482 = vmatpush1.bf16.msra.mxu0 %v1115
        %1483 = vmatprep.subr.bf16.mxu0 %v1110
        %1484 = vmatpush1.bf16.msra.mxu0 %v1109
        %1485 = vmatprep.subr.bf16.mxu0 %v1104
        %1486 = vmatpush1.bf16.msra.mxu0 %v1103
        %1487 = vmatprep.subr.bf16.mxu0 %v1098
        %1488 = vmatpush1.bf16.msra.mxu0 %v1097
        %1489 = vmatprep.subr.bf16.mxu0 %v1092
        %1490 = vmatpush1.bf16.msra.mxu0 %v1091
        %1491 = vmatprep.subr.bf16.mxu0 %v1182
        %1492 = vmatpush2.bf16.msra.mxu0 %v1181
        %1493 = vmatprep.subr.bf16.mxu0 %v1176
        %1494 = vmatpush2.bf16.msra.mxu0 %v1175
        %1495 = vmatprep.subr.bf16.mxu0 %v1170
        %1496 = vmatpush2.bf16.msra.mxu0 %v1169
        %1497 = vmatprep.subr.bf16.mxu0 %v1164
        %1498 = vmatpush2.bf16.msra.mxu0 %v1163
        %1499 = vmatprep.subr.bf16.mxu0 %v1158
        %1500 = vmatpush2.bf16.msra.mxu0 %v1157
        %1501 = vmatprep.subr.bf16.mxu0 %v1152
        %1502 = vmatpush2.bf16.msra.mxu0 %v1151
        %1503 = vmatprep.subr.bf16.mxu0 %v1146
        %1504 = vmatpush2.bf16.msra.mxu0 %v1145
        %1505 = vmatprep.subr.bf16.mxu0 %v1140
        %1506 = vmatpush2.bf16.msra.mxu0 %v1139
        %1507 = vmatprep.mubr.bf16.mxu0 %v320
        %1508 = vmatmul.mubr.bf16.gmra.mxu0 %v319
        %v1509 = vpop.f32.mrf.mxu0
        %v1510 = vadd.f32 0.0, %v1509
        %v1511 = vpop.f32.mrf.mxu0
        %v1512 = vadd.f32 0.0, %v1511
        %v1513 = vpop.f32.mrf.mxu0
        %v1514 = vadd.f32 0.0, %v1513
        %v1515 = vpop.f32.mrf.mxu0
        %v1516 = vadd.f32 0.0, %v1515
        %1517 = vdwg.mxu0
        %1518 = vmatprep.subr.bf16.mxu0 %v1230
        %1519 = vmatpush1.bf16.msra.mxu0 %v1229
        %1520 = vmatprep.subr.bf16.mxu0 %v1224
        %1521 = vmatpush1.bf16.msra.mxu0 %v1223
        %1522 = vmatprep.subr.bf16.mxu0 %v1218
        %1523 = vmatpush1.bf16.msra.mxu0 %v1217
        %1524 = vmatprep.subr.bf16.mxu0 %v1212
        %1525 = vmatpush1.bf16.msra.mxu0 %v1211
        %1526 = vmatprep.subr.bf16.mxu0 %v1206
        %1527 = vmatpush1.bf16.msra.mxu0 %v1205
        %1528 = vmatprep.subr.bf16.mxu0 %v1200
        %1529 = vmatpush1.bf16.msra.mxu0 %v1199
        %1530 = vmatprep.subr.bf16.mxu0 %v1194
        %1531 = vmatpush1.bf16.msra.mxu0 %v1193
        %1532 = vmatprep.subr.bf16.mxu0 %v1188
        %1533 = vmatpush1.bf16.msra.mxu0 %v1187
        %1534 = vmatprep.subr.bf16.mxu0 %v1278
        %1535 = vmatpush2.bf16.msra.mxu0 %v1277
        %1536 = vmatprep.subr.bf16.mxu0 %v1272
        %1537 = vmatpush2.bf16.msra.mxu0 %v1271
        %1538 = vmatprep.subr.bf16.mxu0 %v1266
        %1539 = vmatpush2.bf16.msra.mxu0 %v1265
        %1540 = vmatprep.subr.bf16.mxu0 %v1260
        %1541 = vmatpush2.bf16.msra.mxu0 %v1259
        %1542 = vmatprep.subr.bf16.mxu0 %v1254
        %1543 = vmatpush2.bf16.msra.mxu0 %v1253
        %1544 = vmatprep.subr.bf16.mxu0 %v1248
        %1545 = vmatpush2.bf16.msra.mxu0 %v1247
        %1546 = vmatprep.subr.bf16.mxu0 %v1242
        %1547 = vmatpush2.bf16.msra.mxu0 %v1241
        %1548 = vmatprep.subr.bf16.mxu0 %v1236
        %1549 = vmatpush2.bf16.msra.mxu0 %v1235
        %1550 = vmatprep.mubr.bf16.mxu0 %v322
        %1551 = vmatmul.mubr.bf16.gmra.mxu0 %v321
        %v1552 = vpop.f32.mrf.mxu0
        %v1553 = vadd.f32 %v1510, %v1552
        %v1554 = vpop.f32.mrf.mxu0
        %v1555 = vadd.f32 %v1512, %v1554
        %v1556 = vpop.f32.mrf.mxu0
        %v1557 = vadd.f32 %v1514, %v1556
        %v1558 = vpop.f32.mrf.mxu0
        %v1559 = vadd.f32 %v1516, %v1558
        %1560 = vdwg.mxu0
        %1561 = vmatprep.subr.bf16.mxu0 %v1136
        %1562 = vmatpush1.bf16.msra.mxu0 %v1135
        %1563 = vmatprep.subr.bf16.mxu0 %v1130
        %1564 = vmatpush1.bf16.msra.mxu0 %v1129
        %1565 = vmatprep.subr.bf16.mxu0 %v1124
        %1566 = vmatpush1.bf16.msra.mxu0 %v1123
        %1567 = vmatprep.subr.bf16.mxu0 %v1118
        %1568 = vmatpush1.bf16.msra.mxu0 %v1117
        %1569 = vmatprep.subr.bf16.mxu0 %v1112
        %1570 = vmatpush1.bf16.msra.mxu0 %v1111
        %1571 = vmatprep.subr.bf16.mxu0 %v1106
        %1572 = vmatpush1.bf16.msra.mxu0 %v1105
        %1573 = vmatprep.subr.bf16.mxu0 %v1100
        %1574 = vmatpush1.bf16.msra.mxu0 %v1099
        %1575 = vmatprep.subr.bf16.mxu0 %v1094
        %1576 = vmatpush1.bf16.msra.mxu0 %v1093
        %1577 = vmatprep.subr.bf16.mxu0 %v1184
        %1578 = vmatpush2.bf16.msra.mxu0 %v1183
        %1579 = vmatprep.subr.bf16.mxu0 %v1178
        %1580 = vmatpush2.bf16.msra.mxu0 %v1177
        %1581 = vmatprep.subr.bf16.mxu0 %v1172
        %1582 = vmatpush2.bf16.msra.mxu0 %v1171
        %1583 = vmatprep.subr.bf16.mxu0 %v1166
        %1584 = vmatpush2.bf16.msra.mxu0 %v1165
        %1585 = vmatprep.subr.bf16.mxu0 %v1160
        %1586 = vmatpush2.bf16.msra.mxu0 %v1159
        %1587 = vmatprep.subr.bf16.mxu0 %v1154
        %1588 = vmatpush2.bf16.msra.mxu0 %v1153
        %1589 = vmatprep.subr.bf16.mxu0 %v1148
        %1590 = vmatpush2.bf16.msra.mxu0 %v1147
        %1591 = vmatprep.subr.bf16.mxu0 %v1142
        %1592 = vmatpush2.bf16.msra.mxu0 %v1141
        %1593 = vmatprep.mubr.bf16.mxu0 %v320
        %1594 = vmatmul.mubr.bf16.gmra.mxu0 %v319
        %v1595 = vpop.f32.mrf.mxu0
        %v1596 = vadd.f32 0.0, %v1595
        %v1597 = vpop.f32.mrf.mxu0
        %v1598 = vadd.f32 0.0, %v1597
        %v1599 = vpop.f32.mrf.mxu0
        %v1600 = vadd.f32 0.0, %v1599
        %v1601 = vpop.f32.mrf.mxu0
        %v1602 = vadd.f32 0.0, %v1601
        %1603 = vdwg.mxu0
        %1604 = vmatprep.subr.bf16.mxu0 %v1232
        %1605 = vmatpush1.bf16.msra.mxu0 %v1231
        %1606 = vmatprep.subr.bf16.mxu0 %v1226
        %1607 = vmatpush1.bf16.msra.mxu0 %v1225
        %1608 = vmatprep.subr.bf16.mxu0 %v1220
        %1609 = vmatpush1.bf16.msra.mxu0 %v1219
        %1610 = vmatprep.subr.bf16.mxu0 %v1214
        %1611 = vmatpush1.bf16.msra.mxu0 %v1213
        %1612 = vmatprep.subr.bf16.mxu0 %v1208
        %1613 = vmatpush1.bf16.msra.mxu0 %v1207
        %1614 = vmatprep.subr.bf16.mxu0 %v1202
        %1615 = vmatpush1.bf16.msra.mxu0 %v1201
        %1616 = vmatprep.subr.bf16.mxu0 %v1196
        %1617 = vmatpush1.bf16.msra.mxu0 %v1195
        %1618 = vmatprep.subr.bf16.mxu0 %v1190
        %1619 = vmatpush1.bf16.msra.mxu0 %v1189
        %1620 = vmatprep.subr.bf16.mxu0 %v1280
        %1621 = vmatpush2.bf16.msra.mxu0 %v1279
        %1622 = vmatprep.subr.bf16.mxu0 %v1274
        %1623 = vmatpush2.bf16.msra.mxu0 %v1273
        %1624 = vmatprep.subr.bf16.mxu0 %v1268
        %1625 = vmatpush2.bf16.msra.mxu0 %v1267
        %1626 = vmatprep.subr.bf16.mxu0 %v1262
        %1627 = vmatpush2.bf16.msra.mxu0 %v1261
        %1628 = vmatprep.subr.bf16.mxu0 %v1256
        %1629 = vmatpush2.bf16.msra.mxu0 %v1255
        %1630 = vmatprep.subr.bf16.mxu0 %v1250
        %1631 = vmatpush2.bf16.msra.mxu0 %v1249
        %1632 = vmatprep.subr.bf16.mxu0 %v1244
        %1633 = vmatpush2.bf16.msra.mxu0 %v1243
        %1634 = vmatprep.subr.bf16.mxu0 %v1238
        %1635 = vmatpush2.bf16.msra.mxu0 %v1237
        %1636 = vmatprep.mubr.bf16.mxu0 %v322
        %1637 = vmatmul.mubr.bf16.gmra.mxu0 %v321
        %v1638 = vpop.f32.mrf.mxu0
        %v1639 = vadd.f32 %v1596, %v1638
        %v1640 = vpop.f32.mrf.mxu0
        %v1641 = vadd.f32 %v1598, %v1640
        %v1642 = vpop.f32.mrf.mxu0
        %v1643 = vadd.f32 %v1600, %v1642
        %v1644 = vpop.f32.mrf.mxu0
        %v1645 = vadd.f32 %v1602, %v1644
        %1646 = vdwg.mxu0
        %1647 = vmatprep.subr.bf16.mxu0 %v1138
        %1648 = vmatpush1.bf16.msra.mxu0 %v1137
        %1649 = vmatprep.subr.bf16.mxu0 %v1132
        %1650 = vmatpush1.bf16.msra.mxu0 %v1131
        %1651 = vmatprep.subr.bf16.mxu0 %v1126
        %1652 = vmatpush1.bf16.msra.mxu0 %v1125
        %1653 = vmatprep.subr.bf16.mxu0 %v1120
        %1654 = vmatpush1.bf16.msra.mxu0 %v1119
        %1655 = vmatprep.subr.bf16.mxu0 %v1114
        %1656 = vmatpush1.bf16.msra.mxu0 %v1113
        %1657 = vmatprep.subr.bf16.mxu0 %v1108
        %1658 = vmatpush1.bf16.msra.mxu0 %v1107
        %1659 = vmatprep.subr.bf16.mxu0 %v1102
        %1660 = vmatpush1.bf16.msra.mxu0 %v1101
        %1661 = vmatprep.subr.bf16.mxu0 %v1096
        %1662 = vmatpush1.bf16.msra.mxu0 %v1095
        %1663 = vmatprep.subr.bf16.mxu0 %v1186
        %1664 = vmatpush2.bf16.msra.mxu0 %v1185
        %1665 = vmatprep.subr.bf16.mxu0 %v1180
        %1666 = vmatpush2.bf16.msra.mxu0 %v1179
        %1667 = vmatprep.subr.bf16.mxu0 %v1174
        %1668 = vmatpush2.bf16.msra.mxu0 %v1173
        %1669 = vmatprep.subr.bf16.mxu0 %v1168
        %1670 = vmatpush2.bf16.msra.mxu0 %v1167
        %1671 = vmatprep.subr.bf16.mxu0 %v1162
        %1672 = vmatpush2.bf16.msra.mxu0 %v1161
        %1673 = vmatprep.subr.bf16.mxu0 %v1156
        %1674 = vmatpush2.bf16.msra.mxu0 %v1155
        %1675 = vmatprep.subr.bf16.mxu0 %v1150
        %1676 = vmatpush2.bf16.msra.mxu0 %v1149
        %1677 = vmatprep.subr.bf16.mxu0 %v1144
        %1678 = vmatpush2.bf16.msra.mxu0 %v1143
        %1679 = vmatprep.mubr.bf16.mxu0 %v320
        %1680 = vmatmul.mubr.bf16.gmra.mxu0 %v319
        %v1681 = vpop.f32.mrf.mxu0
        %v1682 = vadd.f32 0.0, %v1681
        %v1683 = vpop.f32.mrf.mxu0
        %v1684 = vadd.f32 0.0, %v1683
        %v1685 = vpop.f32.mrf.mxu0
        %v1686 = vadd.f32 0.0, %v1685
        %v1687 = vpop.f32.mrf.mxu0
        %v1688 = vadd.f32 0.0, %v1687
        %1689 = vdwg.mxu0
        %1690 = vmatprep.subr.bf16.mxu0 %v1234
        %1691 = vmatpush1.bf16.msra.mxu0 %v1233
        %1692 = vmatprep.subr.bf16.mxu0 %v1228
        %1693 = vmatpush1.bf16.msra.mxu0 %v1227
        %1694 = vmatprep.subr.bf16.mxu0 %v1222
        %1695 = vmatpush1.bf16.msra.mxu0 %v1221
        %1696 = vmatprep.subr.bf16.mxu0 %v1216
        %1697 = vmatpush1.bf16.msra.mxu0 %v1215
        %1698 = vmatprep.subr.bf16.mxu0 %v1210
        %1699 = vmatpush1.bf16.msra.mxu0 %v1209
        %1700 = vmatprep.subr.bf16.mxu0 %v1204
        %1701 = vmatpush1.bf16.msra.mxu0 %v1203
        %1702 = vmatprep.subr.bf16.mxu0 %v1198
        %1703 = vmatpush1.bf16.msra.mxu0 %v1197
        %1704 = vmatprep.subr.bf16.mxu0 %v1192
        %1705 = vmatpush1.bf16.msra.mxu0 %v1191
        %1706 = vmatprep.subr.bf16.mxu0 %v1282
        %1707 = vmatpush2.bf16.msra.mxu0 %v1281
        %1708 = vmatprep.subr.bf16.mxu0 %v1276
        %1709 = vmatpush2.bf16.msra.mxu0 %v1275
        %1710 = vmatprep.subr.bf16.mxu0 %v1270
        %1711 = vmatpush2.bf16.msra.mxu0 %v1269
        %1712 = vmatprep.subr.bf16.mxu0 %v1264
        %1713 = vmatpush2.bf16.msra.mxu0 %v1263
        %1714 = vmatprep.subr.bf16.mxu0 %v1258
        %1715 = vmatpush2.bf16.msra.mxu0 %v1257
        %1716 = vmatprep.subr.bf16.mxu0 %v1252
        %1717 = vmatpush2.bf16.msra.mxu0 %v1251
        %1718 = vmatprep.subr.bf16.mxu0 %v1246
        %1719 = vmatpush2.bf16.msra.mxu0 %v1245
        %1720 = vmatprep.subr.bf16.mxu0 %v1240
        %1721 = vmatpush2.bf16.msra.mxu0 %v1239
        %1722 = vmatprep.mubr.bf16.mxu0 %v322
        %1723 = vmatmul.mubr.bf16.gmra.mxu0 %v321
        %v1724 = vpop.f32.mrf.mxu0
        %v1725 = vadd.f32 %v1682, %v1724
        %v1726 = vpop.f32.mrf.mxu0
        %v1727 = vadd.f32 %v1684, %v1726
        %v1728 = vpop.f32.mrf.mxu0
        %v1729 = vadd.f32 %v1686, %v1728
        %v1730 = vpop.f32.mrf.mxu0
        %v1731 = vadd.f32 %v1688, %v1730
        %1732 = vdwg.mxu0
        %v1733 = vadd.f32 %v299, %v1553
        %v1734 = vadd.f32 %v300, %v1555
        %v1735 = vadd.f32 %v301, %v1639
        %v1736 = vadd.f32 %v302, %v1641
        %v1737 = vadd.f32 %v303, %v1725
        %v1738 = vadd.f32 %v304, %v1727
        %v1739 = vadd.f32 %v305, %v1557
        %v1740 = vadd.f32 %v306, %v1559
        %v1741 = vadd.f32 %v307, %v1643
        %v1742 = vadd.f32 %v308, %v1645
        %v1743 = vadd.f32 %v309, %v1729
        %v1744 = vadd.f32 %v310, %v1731
        %1745 = vst [vmem:[#allocation2] sm:$0xff] %v1733
        %1746 = vst [vmem:[#allocation2 + $0x8] sm:$0xff] %v1734
        %1747 = vst [vmem:[#allocation2 + $0x10] sm:$0xff] %v1735
        %1748 = vst [vmem:[#allocation2 + $0x18] sm:$0xff] %v1736
        %1749 = vst [vmem:[#allocation2 + $0x20] sm:$0xff] %v1737
        %1750 = vst [vmem:[#allocation2 + $0x28] sm:$0xff] %v1738
        %1751 = vst [vmem:[#allocation2 + $0x30] sm:$0xff] %v1739
        %1752 = vst [vmem:[#allocation2 + $0x38] sm:$0xff] %v1740
        %1753 = vst [vmem:[#allocation2 + $0x40] sm:$0xff] %v1741
        %1754 = vst [vmem:[#allocation2 + $0x48] sm:$0xff] %v1742
        %1755 = vst [vmem:[#allocation2 + $0x50] sm:$0xff] %v1743
        %1756 = vst [vmem:[#allocation2 + $0x58] sm:$0xff] %v1744
        %p1757 = scmp.eq.s32.totalorder %s28, 1
        // Predicated region
        $region53: #{tpu_custom_call.1} parent=35 // pred_check
          %p1758 = pneg %p1757
        $region54: #{tpu_custom_call.1} parent=35 // pred_check_branch
          %1760 = sbr.rel (%p1758) target = $region56
        $region55: #{tpu_custom_call.1} parent=35 // pred_region
          %v1761 = vld [vmem:[#allocation2] sm:$0xff]
          %v1762 = vld [vmem:[#allocation2 + $0x8] sm:$0xff]
          %v1763 = vld [vmem:[#allocation2 + $0x10] sm:$0xff]
          %v1764 = vld [vmem:[#allocation2 + $0x18] sm:$0xff]
          %v1765 = vld [vmem:[#allocation2 + $0x20] sm:$0xff]
          %v1766 = vld [vmem:[#allocation2 + $0x28] sm:$0xff]
          %v1767 = vld [vmem:[#allocation2 + $0x30] sm:$0xff]
          %v1768 = vld [vmem:[#allocation2 + $0x38] sm:$0xff]
          %v1769 = vld [vmem:[#allocation2 + $0x40] sm:$0xff]
          %v1770 = vld [vmem:[#allocation2 + $0x48] sm:$0xff]
          %v1771 = vld [vmem:[#allocation2 + $0x50] sm:$0xff]
          %v1772 = vld [vmem:[#allocation2 + $0x58] sm:$0xff]
          %v1773 = vld [vmem:[#allocation9] sm:$0x3f]
          %v1775 = vlaneseq
          %v1776 = vshrl.u32 %v1775, 7
          %v1777 = vsub.s32 0, %v1776
          %v1778 = vrot.slane %v1773, %v1777
          %v1779 = vlaneseq
          %v1780 = vshrl.u32 %v1779, 7
          %v1781 = vsub.s32 1, %v1780
          %v1782 = vrot.slane %v1773, %v1781
          %v1783 = vlaneseq
          %v1784 = vshrl.u32 %v1783, 7
          %v1785 = vsub.s32 2, %v1784
          %v1786 = vrot.slane %v1773, %v1785
          %v1787 = vlaneseq
          %v1788 = vshrl.u32 %v1787, 7
          %v1789 = vsub.s32 3, %v1788
          %v1790 = vrot.slane %v1773, %v1789
          %v1791 = vlaneseq
          %v1792 = vshrl.u32 %v1791, 7
          %v1793 = vsub.s32 4, %v1792
          %v1794 = vrot.slane %v1773, %v1793
          %v1795 = vlaneseq
          %v1796 = vshrl.u32 %v1795, 7
          %v1797 = vsub.s32 5, %v1796
          %v1798 = vrot.slane %v1773, %v1797
          %v1805 = vmul.f32 %v1761, %v1778
          %v1806 = vmul.f32 %v1762, %v1782
          %v1807 = vmul.f32 %v1763, %v1786
          %v1808 = vmul.f32 %v1764, %v1790
          %v1809 = vmul.f32 %v1765, %v1794
          %v1810 = vmul.f32 %v1766, %v1798
          %v1811 = vmul.f32 %v1767, %v1778
          %v1812 = vmul.f32 %v1768, %v1782
          %v1813 = vmul.f32 %v1769, %v1786
          %v1814 = vmul.f32 %v1770, %v1790
          %v1815 = vmul.f32 %v1771, %v1794
          %v1816 = vmul.f32 %v1772, %v1798
          %v1817 = vadd.f32 %v1805, %v1806
          %v1818 = vadd.f32 %v1817, %v1807
          %v1819 = vadd.f32 %v1818, %v1808
          %v1820 = vadd.f32 %v1819, %v1809
          %v1821 = vadd.f32 %v1820, %v1810
          %1822 = vadd.xlane.f32.xlu0 %v1821
          %v1823 = vpop.xlane.xlu0 %1822
          %v1824 = vadd.f32 %v1811, %v1812
          %v1825 = vadd.f32 %v1824, %v1813
          %v1826 = vadd.f32 %v1825, %v1814
          %v1827 = vadd.f32 %v1826, %v1815
          %v1828 = vadd.f32 %v1827, %v1816
          %1829 = vadd.xlane.f32.xlu0 %v1828
          %v1830 = vpop.xlane.xlu0 %1829
          %s1831 = sld [smem:[#allocation3]]
          %v1832 = vstv %s1831
          %v1833 = vadd.f32 %v1823, %v1832
          %v1834 = vadd.f32 %v1830, %v1832
          %v1835 = vxor.u32 %v1833, 2147483648
          %v1836 = vxor.u32 %v1834, 2147483648
          %v1837 = vmul.f32 %v1835, 1.442695
          %v1838 = vpow.pop %v1837
          %v1839 = vmul.f32 %v1836, 1.442695
          %v1840 = vpow.pop %v1839
          %v1841 = vadd.f32 %v1838, 1.0
          %v1842 = vadd.f32 %v1840, 1.0
          %v1843 = vrcp.pop %v1841
          %v1844 = vmul.f32 1.0, %v1843
          %v1845 = vrcp.pop %v1842
          %v1846 = vmul.f32 1.0, %v1845
          %v1849 = vlaneseq
          %v1850 = vand.u32 %v1849, 127
          %v1851 = vlaneseq
          %v1852 = vshrl.u32 %v1851, 7
          %v1853 = vsub.s32 %v1850, %v1852
          %v1854 = vrot.slane %v1844, %v1853
          %v1855 = vadd.s32 %v1850, 4294967288
          %v1856 = vlaneseq
          %v1857 = vshrl.u32 %v1856, 7
          %v1858 = vsub.s32 %v1855, %v1857
          %v1859 = vrot.slane %v1846, %v1858
          %vm1860 = vcmask 130112
          %v1861 = vsel %vm1860, %v1859, %v1854
          %vm1863 = vcmask 122880
          %1864 = vst.msk [vmem:[#allocation10] sm:$0x1] %vm1863, %v1861
        $region56: #{tpu_custom_call.1} parent=35 // pred_fallthru
          _
        // Predicated region
        $region57: #{tpu_custom_call.1} parent=35 // pred_check
          %p1865 = pneg %p149
        $region58: #{tpu_custom_call.1} parent=35 // pred_check_branch
          %1867 = sbr.rel (%p1865) target = $region60
        $region59: #{tpu_custom_call.1} parent=35 // pred_region
          %s1869 = ssub.s32 16, 16
          %1870 = vsyncadd [#allocation6], %s1869
          %s1871 = smul.addr %s27, 16
          %s1872 = scalar_lea.hbm %s4, %s1871
          %s1874 = sshll.u32 [#allocation10], 4
          %s1875 = int_to_ptr.vmem [resolvable:$true] %s1874
          %1877 = dma.vmem_to_hbm [thread:$0]  %s1875, 16, %s1872, [#allocation6]
        $region60: #{tpu_custom_call.1} parent=35 // pred_fallthru
          _
        // Predicated region
        $region61: #{tpu_custom_call.1} parent=35 // pred_check
          %p1878 = pneg %p149
        $region62: #{tpu_custom_call.1} parent=35 // pred_check_branch
          %1880 = sbr.rel (%p1878) target = $region64
        $region63: #{tpu_custom_call.1} parent=35 // pred_region
          %1881 = dma.done [#allocation6], 16
        $region64: #{tpu_custom_call.1} parent=35 // pred_fallthru
          _
      $region36: #{tpu_custom_call.1} parent=5 // pred_fallthru
        _
      %p1882 = scmp.le.s32.totalorder 2, %s18
      // Predicated region
      $region65: #{tpu_custom_call.1} parent=5 // pred_check
        %p1883 = pneg %p1882
      $region66: #{tpu_custom_call.1} parent=5 // pred_check_branch
        %1885 = sbr.rel (%p1883) target = $region68
      $region67: #{tpu_custom_call.1} parent=5 // pred_region
        %s1886 = ssub.s32 %s18, 2
      $region68: #{tpu_custom_call.1} parent=5 // pred_fallthru
        _
    $region6: #{tpu_custom_call.1} parent=1 // loop_footer
      %s22 = sadd.s32 1, %s18
    $region7: #{tpu_custom_call.1} parent=1 // loop_footer_branch
      %17 = sbr.rel target = $region3
    $region8: #{tpu_custom_call.1} parent=1 // loop_exit
      _
    %1887 = vsyncpa [#allocation5], 1
    %s1888 = scalar_lea.sflag [#allocation5], 1
    %1889 = vsyncpa %s1888, 1
    %1890 = vsyncpa [#allocation8], 1
    %s1891 = scalar_lea.sflag [#allocation8], 1
    %1892 = vsyncpa %s1891, 1
    %1893 = vsyncpa [#allocation6], 1
    %s1894 = scalar_lea.sflag [#allocation6], 1
    %1895 = vsyncpa %s1894, 1

</llo_original>
